<compile_context>
chip_gen: v7x
topology: tpu7x:2x2x1
jax: 0.10.0
libtpu: 0.0.40
codegen_flags: <defaults>
</compile_context>

<pallas_src>
from functools import partial

import jax
import jax.numpy as jnp
from jax.experimental import pallas as pl
from jax.experimental.pallas import tpu as pltpu

# Name shims (keep the reference-API names first, fall back for older jax builds).
_MS = getattr(pltpu, "MemorySpace", None) or getattr(pltpu, "TPUMemorySpace")
_CompilerParams = getattr(pltpu, "CompilerParams", None) or getattr(pltpu, "TPUCompilerParams")


def _round_up(x, m):
    return ((x + m - 1) // m) * m


# ----------------------------- Pallas kernel -----------------------------

def _spconv_gemm_kernel(x_ref, w_ref, o_ref):
    # x_ref: (tm, Kfold_pad) bf16 gathered voxel patches for this output row-tile
    # w_ref: (Kfold_pad, Cout_pad) bf16 full weight matrix, whole-array VMEM resident
    #        (memory_space=VMEM -> DMA'd once, not double-buffered by the pipeline)
    # o_ref: (tm, Cout_pad) f32  (f32 accumulation on the MXU)
    o_ref[...] = jnp.dot(x_ref[...], w_ref[...], preferred_element_type=jnp.float32)


def _vmem_bytes_estimate(tm, kfold, cout_pad):
    # 2x pipelined patch tile (bf16) + 2x pipelined out tile (f32) + single weight copy (bf16)
    return 2 * tm * kfold * 2 + 2 * tm * cout_pad * 4 + kfold * cout_pad * 2


def _pick_tile(no, kfold, cout_pad, vmem_budget=40 * 1024 * 1024):
    """Largest MXU-friendly row tile that fits the VMEM budget.

    No forced grid split: v5e/v6e have a single TensorCore (the grid is a serial loop,
    splitting only adds per-step overhead and shrinks the MXU M dimension); v7x gets its
    two-core 'parallel' sharding from the natural M grid at real problem sizes, not from
    a shrunken tm.
    """
    no_al = _round_up(no, 16)
    tm = 16
    for cand in (512, 384, 256, 128, 64, 32, 16):
        if cand <= no_al and _vmem_bytes_estimate(cand, kfold, cout_pad) <= vmem_budget:
            tm = cand
            break
    return tm, _round_up(no, tm)


def _implicit_gemm(patches, weight, tm):
    """patches: [No_pad, Kfold_pad] bf16, weight: [Kfold_pad, Cout_pad] bf16 -> f32."""
    no_pad, kfold = patches.shape
    cout_pad = weight.shape[-1]
    # Explicit scoped-VMEM limit (default is 32 MiB; v7x physical is only 64 MiB).
    vmem_limit = int(min(max(_vmem_bytes_estimate(tm, kfold, cout_pad) + (8 << 20), 32 << 20),
                         56 << 20))
    return pl.pallas_call(
        _spconv_gemm_kernel,
        out_shape=jax.ShapeDtypeStruct((no_pad, cout_pad), jnp.float32),
        grid=(no_pad // tm,),
        in_specs=[
            # voxel row-tile of folded patches (lane dim = Kfold_pad, multiple of 128)
            pl.BlockSpec((tm, kfold), lambda i: (i, 0)),
            # whole weight, VMEM-resident, single copy (no 2-deep pipeline buffer)
            pl.BlockSpec(memory_space=_MS.VMEM),
        ],
        out_specs=pl.BlockSpec((tm, cout_pad), lambda i: (i, 0)),
        compiler_params=_CompilerParams(
            dimension_semantics=("parallel",),
            vmem_limit_bytes=vmem_limit,
        ),
    )(patches, weight)


# ------------------------- conv layer (glue + kernel) -------------------------

def sparse_conv3d_dense(x_dense, weight, ksize, stride, padding, dilation, cout_pad):
    """x_dense: [B, D, H, W, Cin_carry]  (Cin_carry >= weight's Cin; extra channels are zero)
       weight:  [k, k, k, Cin, Cout]
       returns: [B, Do, Ho, Wo, cout_pad] f32 with the real Cout in the leading channels."""
    B, D, H, W, cin_carry = x_dense.shape
    cin = weight.shape[3]
    cout = weight.shape[4]

    def out_dim(n):
        return (n + 2 * padding - dilation * (ksize - 1) - 1) // stride + 1

    Do, Ho, Wo = out_dim(D), out_dim(H), out_dim(W)

    # bf16 inputs for the MXU (accumulation stays f32 inside the kernel); also halves
    # the bytes of the blown-up im2col intermediate below.
    x_bf = x_dense.astype(jnp.bfloat16)

    # TODO(synk): fold the zero-padding into the gather at scale instead of materializing xp.
    xp = jnp.pad(
        x_bf,
        ((0, 0), (padding, padding), (padding, padding), (padding, padding), (0, 0)),
    )

    # im2col gather directly in the FOLDED [No, Kvol*Cin_carry] layout; the full reduction
    # then runs as ONE MXU contraction per row tile.
    # TODO(synk): eliminate this Kvol-sized HBM intermediate (halo-tile DMA + shifted
    #             in-kernel views, or a rulebook gather via scalar prefetch) when scaled up
    #             -- it is the dominant HBM cost at real sizes.
    slabs = []
    for kd in range(ksize):
        for kh in range(ksize):
            for kw in range(ksize):
                sl = xp[
                    :,
                    kd * dilation: kd * dilation + (Do - 1) * stride + 1: stride,
                    kh * dilation: kh * dilation + (Ho - 1) * stride + 1: stride,
                    kw * dilation: kw * dilation + (Wo - 1) * stride + 1: stride,
                    :,
                ]
                slabs.append(sl.reshape(B * Do * Ho * Wo, cin_carry))
    patches = jnp.concatenate(slabs, axis=-1)               # [No, Kvol*Cin_carry] bf16
    no, kfold = patches.shape

    # Lane-align the contraction dim: pad Kfold up to a multiple of 128 with zero columns
    # (matching zero rows on the weight) -> unmasked loads + full MXU K granularity.
    kfold_pad = _round_up(kfold, 128)

    # Row tile + row padding (multiple of tm so the grid divides evenly).
    tm, no_pad = _pick_tile(no, kfold_pad, cout_pad)
    patches = jnp.pad(patches, ((0, no_pad - no), (0, kfold_pad - kfold)))

    # Weight as a [Kfold_pad, Cout_pad] bf16 matrix.  Input-channel padding (carried
    # lane-dense activations from the previous layer) and Cout padding (lane-dense output
    # stores) are zero rows / columns, so they contribute nothing.
    w = weight
    if cin_carry > cin:
        w = jnp.pad(w, ((0, 0), (0, 0), (0, 0), (0, cin_carry - cin), (0, 0)))
    wmat = w.reshape(ksize ** 3 * cin_carry, cout)
    wmat = jnp.pad(wmat, ((0, kfold_pad - kfold), (0, cout_pad - cout))).astype(jnp.bfloat16)

    out = _implicit_gemm(patches, wmat, tm)                  # [No_pad, Cout_pad] f32
    # Keep the lane-dense Cout_pad channel width for the next layer; only drop row padding.
    return out[:no, :].reshape(B, Do, Ho, Wo, cout_pad)


# ----------------------------- module equivalent -----------------------------

class SparseConv3dTestJax:
    """JAX/Pallas equivalent of SparseConv3dTestTorch (bias=False, stacked SparseConv3d)."""

    def __init__(self, num_layers, ndim, shape, in_channels, out_channels,
                 kernel_size, stride, padding, dilation, key):
        assert ndim == 3
        self.shape = tuple(shape)
        self.ksize = kernel_size
        self.stride = stride
        self.padding = padding
        self.dilation = dilation
        self.out_channels = out_channels
        self.cout_pad = max(128, _round_up(out_channels, 128))
        self.weights = []
        cin = in_channels
        for _ in range(num_layers):
            key, sub = jax.random.split(key)
            fan_in = cin * kernel_size ** 3
            w = jax.random.normal(
                sub, (kernel_size, kernel_size, kernel_size, cin, out_channels),
                dtype=jnp.float32) * (1.0 / fan_in) ** 0.5
            self.weights.append(w)
            cin = out_channels

    def __call__(self, features, coors, batch_size):
        coors = coors.astype(jnp.int32)
        D, H, W = self.shape
        cin = features.shape[-1]
        # Voxelize the sparse tensor (matches SparseConvTensor.dense(); inputs here have
        # unique voxel coordinates so add vs overwrite is equivalent).
        # TODO(synk): truly sparse rulebook (scalar-prefetch gather indices) so compute and
        #             HBM traffic scale with nnz instead of the dense volume.
        dense = jnp.zeros((batch_size, D, H, W, cin), jnp.float32)
        dense = dense.at[coors[:, 0], coors[:, 1], coors[:, 2], coors[:, 3]].add(features)
        x = dense
        for w in self.weights:
            x = sparse_conv3d_dense(x, w, self.ksize, self.stride,
                                    self.padding, self.dilation, self.cout_pad)
        # Slice the lane-dense channel padding away once, after the whole stack.
        x = x[..., : self.out_channels]
        # TODO(synk): we return the dense NCDHW output (== output SparseConvTensor.dense());
        # the sparse (features, indices) pair representation itself is not re-extracted.
        return jnp.transpose(x, (0, 4, 1, 2, 3))  # NCDHW


# ----------------------------------- main -----------------------------------

if __name__ == "__main__":
    key = jax.random.PRNGKey(0)

    num_layers = 2
    ndim = 3
    shape = (8, 8, 8)          # sparse spatial shape (D, H, W)
    in_channels = 4
    out_channels = 8
    kernel_size = 3
    stride = 2
    padding = 1
    dilation = 1
    batch_size = 2
    num_points = 64

    k_model, k_idx, k_feat = jax.random.split(key, 3)

    model = SparseConv3dTestJax(num_layers, ndim, shape, in_channels, out_channels,
                                kernel_size, stride, padding, dilation, key=k_model)

    # Deterministic unique active voxels: sample flat indices without replacement.
    D, H, W = shape
    total = batch_size * D * H * W
    flat = jax.random.permutation(k_idx, total)[:num_points]
    b = flat // (D * H * W)
    rem = flat % (D * H * W)
    z = rem // (H * W)
    rem = rem % (H * W)
    y = rem // W
    x = rem % W
    coors = jnp.stack([b, z, y, x], axis=1).astype(jnp.int32)   # [N, 4] = [batch, z, y, x]

    features = jax.random.normal(k_feat, (num_points, in_channels), dtype=jnp.float32)

    @partial(jax.jit, static_argnums=(2,))
    def run(feats, crs, bs):
        return model(feats, crs, bs)

    out = run(features, coors, batch_size)
    out = jax.block_until_ready(out)

    assert out.shape == (batch_size, out_channels, 2, 2, 2), out.shape
    assert out.dtype == jnp.float32
    print("KERNEL_OK")
</pallas_src>

<mosaic_0001>
module attributes {stable_mosaic.version = 11 : i64} {
  func.func @_spconv_gemm_kernel(%arg0: i32, %arg1: memref<128x128xbf16, #tpu.memory_space<vmem>>, %arg2: memref<128x128xbf16, #tpu.memory_space<vmem>>, %arg3: memref<128x128xf32, #tpu.memory_space<vmem>>) attributes {dimension_semantics = [#tpu.dimension_semantics<parallel>], iteration_bounds = array<i64: 1>, scalar_prefetch = 0 : i64, scratch_operands = 0 : i64, tpu.core_type = #tpu.core_type<tc>, window_params = [{transform_indices = @transform_0, window_bounds = array<i64: 128, 128>}, {pipeline_mode = #tpu.pipeline_mode<synchronous>, transform_indices = @transform_1, window_bounds = array<i64: 128, 128>}, {transform_indices = @transform_2, window_bounds = array<i64: 128, 128>}]} {
    %c0 = arith.constant 0 : index
    %c0_0 = arith.constant 0 : index
    %0 = vector.load %arg1[%c0, %c0_0] : memref<128x128xbf16, #tpu.memory_space<vmem>>, vector<128x128xbf16>
    %c0_1 = arith.constant 0 : index
    %c0_2 = arith.constant 0 : index
    %1 = vector.load %arg2[%c0_1, %c0_2] : memref<128x128xbf16, #tpu.memory_space<vmem>>, vector<128x128xbf16>
    %cst = arith.constant dense<0.000000e+00> : vector<128x128xf32>
    %2 = tpu.matmul %0, %1, %cst {dimension_numbers = #tpu.dot_dimension_numbers<[1], [0], [0], [1], [0, 0, 1, 1], [], []>} : vector<128x128xbf16>, vector<128x128xbf16>, vector<128x128xf32> -> vector<128x128xf32>
    %c0_3 = arith.constant 0 : index
    %c0_4 = arith.constant 0 : index
    %3 = vector.load %arg3[%c0_3, %c0_4] : memref<128x128xf32, #tpu.memory_space<vmem>>, vector<128x128xf32>
    tpu.vector_store %arg3[%c0_3, %c0_4], %2 {strides = array<i32>} : memref<128x128xf32, #tpu.memory_space<vmem>>, vector<128x128xf32>,
    return
  }
  func.func @transform_0(%arg0: i32) -> (i32, i32) {
    %c0_i32 = arith.constant 0 : i32
    %c0_i32_0 = arith.constant 0 : i32
    return %arg0, %c0_i32 : i32, i32
  }
  func.func @transform_1(%arg0: i32) -> (i32, i32) {
    %c0_i32 = arith.constant 0 : i32
    %c0_i32_0 = arith.constant 0 : i32
    %c0_i32_1 = arith.constant 0 : i32
    return %c0_i32, %c0_i32_0 : i32, i32
  }
  func.func @transform_2(%arg0: i32) -> (i32, i32) {
    %c0_i32 = arith.constant 0 : i32
    %c0_i32_0 = arith.constant 0 : i32
    return %arg0, %c0_i32 : i32, i32
  }
}

module attributes {stable_mosaic.version = 11 : i64} {
  func.func @_spconv_gemm_kernel(%arg0: i32, %arg1: memref<16x3456xbf16, #tpu.memory_space<vmem>>, %arg2: memref<3456x128xbf16, #tpu.memory_space<vmem>>, %arg3: memref<16x128xf32, #tpu.memory_space<vmem>>) attributes {dimension_semantics = [#tpu.dimension_semantics<parallel>], iteration_bounds = array<i64: 1>, scalar_prefetch = 0 : i64, scratch_operands = 0 : i64, tpu.core_type = #tpu.core_type<tc>, window_params = [{transform_indices = @transform_0, window_bounds = array<i64: 16, 3456>}, {pipeline_mode = #tpu.pipeline_mode<synchronous>, transform_indices = @transform_1, window_bounds = array<i64: 3456, 128>}, {transform_indices = @transform_2, window_bounds = array<i64: 16, 128>}]} {
    %c0 = arith.constant 0 : index
    %c0_0 = arith.constant 0 : index
    %0 = vector.load %arg1[%c0, %c0_0] : memref<16x3456xbf16, #tpu.memory_space<vmem>>, vector<16x3456xbf16>
    %c0_1 = arith.constant 0 : index
    %c0_2 = arith.constant 0 : index
    %1 = vector.load %arg2[%c0_1, %c0_2] : memref<3456x128xbf16, #tpu.memory_space<vmem>>, vector<3456x128xbf16>
    %cst = arith.constant dense<0.000000e+00> : vector<16x128xf32>
    %2 = tpu.matmul %0, %1, %cst {dimension_numbers = #tpu.dot_dimension_numbers<[1], [0], [0], [1], [0, 0, 1, 1], [], []>} : vector<16x3456xbf16>, vector<3456x128xbf16>, vector<16x128xf32> -> vector<16x128xf32>
    %c0_3 = arith.constant 0 : index
    %c0_4 = arith.constant 0 : index
    %3 = vector.load %arg3[%c0_3, %c0_4] : memref<16x128xf32, #tpu.memory_space<vmem>>, vector<16x128xf32>
    tpu.vector_store %arg3[%c0_3, %c0_4], %2 {strides = array<i32>} : memref<16x128xf32, #tpu.memory_space<vmem>>, vector<16x128xf32>,
    return
  }
  func.func @transform_0(%arg0: i32) -> (i32, i32) {
    %c0_i32 = arith.constant 0 : i32
    %c0_i32_0 = arith.constant 0 : i32
    return %arg0, %c0_i32 : i32, i32
  }
  func.func @transform_1(%arg0: i32) -> (i32, i32) {
    %c0_i32 = arith.constant 0 : i32
    %c0_i32_0 = arith.constant 0 : i32
    %c0_i32_1 = arith.constant 0 : i32
    return %c0_i32, %c0_i32_0 : i32, i32
  }
  func.func @transform_2(%arg0: i32) -> (i32, i32) {
    %c0_i32 = arith.constant 0 : i32
    %c0_i32_0 = arith.constant 0 : i32
    return %arg0, %c0_i32 : i32, i32
  }
}

</mosaic_0001>

<llo_original>
// kernel: run.2
$region0: #{run.2}
  #allocation0 [shape = 'u32[]', space=smem, size = 0x4, offset = 0x4, fixed_abs, tag = 'smem constant byte address 0x4 - core index']
  #allocation1 [shape = 'u32[144,128]{1,0:T(1,128)}', space=vmem, size = 0x12000, scoped, tag = 'internal scratch']
  %s0 = inlined_call_operand.vmem [shape: bf16[128,128], index: 0, kind: input, shape index: {}]
  %s1 = inlined_call_operand.vmem [shape: bf16[128,128], index: 1, kind: input, shape index: {}]
  %s2 = inlined_call_operand.vmem [shape: f32[128,128], index: 2, kind: output, shape index: {}]
  %s3 = sld [smem:[#allocation0]]
  $region18: #{run.2} parent=0
    _
  %s5 = ssub.s32 1, %s3
  %s6 = scalar_select 0, %s5, %s3
  // Predicated region
  $region2: #{run.2} parent=0 // pred_check
    _
  $region3: #{run.2} parent=0 // pred_check_branch
    %8 = sbr.rel (0) target = $region5
  $region4: #{run.2} parent=0 // pred_region
    _
  $region5: #{run.2} parent=0 // pred_fallthru
    _
  // Predicated region
  $region6: #{run.2} parent=0 // pred_check
    _
  $region7: #{run.2} parent=0 // pred_check_branch
    %10 = sbr.rel (0) target = $region9
  $region8: #{run.2} parent=0 // pred_region
    _
  $region9: #{run.2} parent=0 // pred_fallthru
    _
  %v12 = vld [vmem:[%s0] sm:$0xf]
  %v13 = vld [vmem:[%s0 + $0x4] sm:$0xf]
  %v14 = vld [vmem:[%s0 + $0x8] sm:$0xf]
  %v15 = vld [vmem:[%s0 + $0xc] sm:$0xf]
  %v16 = vld [vmem:[%s0 + $0x10] sm:$0xf]
  %v17 = vld [vmem:[%s0 + $0x14] sm:$0xf]
  %v18 = vld [vmem:[%s0 + $0x18] sm:$0xf]
  %v19 = vld [vmem:[%s0 + $0x1c] sm:$0xf]
  %v20 = vld [vmem:[%s0 + $0x20] sm:$0xf]
  %v21 = vld [vmem:[%s0 + $0x24] sm:$0xf]
  %v22 = vld [vmem:[%s0 + $0x28] sm:$0xf]
  %v23 = vld [vmem:[%s0 + $0x2c] sm:$0xf]
  %v24 = vld [vmem:[%s0 + $0x30] sm:$0xf]
  %v25 = vld [vmem:[%s0 + $0x34] sm:$0xf]
  %v26 = vld [vmem:[%s0 + $0x38] sm:$0xf]
  %v27 = vld [vmem:[%s0 + $0x3c] sm:$0xf]
  %v28 = vld [vmem:[%s1] sm:$0xf]
  %v29 = vld [vmem:[%s1 + $0x4] sm:$0xf]
  %v30 = vld [vmem:[%s1 + $0x8] sm:$0xf]
  %v31 = vld [vmem:[%s1 + $0xc] sm:$0xf]
  %v32 = vld [vmem:[%s1 + $0x10] sm:$0xf]
  %v33 = vld [vmem:[%s1 + $0x14] sm:$0xf]
  %v34 = vld [vmem:[%s1 + $0x18] sm:$0xf]
  %v35 = vld [vmem:[%s1 + $0x1c] sm:$0xf]
  %v36 = vld [vmem:[%s1 + $0x20] sm:$0xf]
  %v37 = vld [vmem:[%s1 + $0x24] sm:$0xf]
  %v38 = vld [vmem:[%s1 + $0x28] sm:$0xf]
  %v39 = vld [vmem:[%s1 + $0x2c] sm:$0xf]
  %v40 = vld [vmem:[%s1 + $0x30] sm:$0xf]
  %v41 = vld [vmem:[%s1 + $0x34] sm:$0xf]
  %v42 = vld [vmem:[%s1 + $0x38] sm:$0xf]
  %v43 = vld [vmem:[%s1 + $0x3c] sm:$0xf]
  %v60 = vunpack.c.l.b16 %v12
  %v61 = vunpack.c.l.b16 %v13
  %v62 = vunpack.c.l.b16 %v14
  %v63 = vunpack.c.l.b16 %v15
  %v64 = vunpack.c.l.b16 %v16
  %v65 = vunpack.c.l.b16 %v17
  %v66 = vunpack.c.l.b16 %v18
  %v67 = vunpack.c.l.b16 %v19
  %v68 = vunpack.c.l.b16 %v20
  %v69 = vunpack.c.l.b16 %v21
  %v70 = vunpack.c.l.b16 %v22
  %v71 = vunpack.c.l.b16 %v23
  %v72 = vunpack.c.l.b16 %v24
  %v73 = vunpack.c.l.b16 %v25
  %v74 = vunpack.c.l.b16 %v26
  %v75 = vunpack.c.l.b16 %v27
  %v76 = vpack.c.b16 %v61, %v60
  %v77 = vpack.c.b16 %v63, %v62
  %v78 = vpack.c.b16 %v65, %v64
  %v79 = vpack.c.b16 %v67, %v66
  %v80 = vpack.c.b16 %v69, %v68
  %v81 = vpack.c.b16 %v71, %v70
  %v82 = vpack.c.b16 %v73, %v72
  %v83 = vpack.c.b16 %v75, %v74
  %v108 = vunpack.c.l.b16 %v28
  %v109 = vunpack.c.l.b16 %v29
  %v110 = vunpack.c.l.b16 %v30
  %v111 = vunpack.c.l.b16 %v31
  %v112 = vunpack.c.l.b16 %v32
  %v113 = vunpack.c.l.b16 %v33
  %v114 = vunpack.c.l.b16 %v34
  %v115 = vunpack.c.l.b16 %v35
  %v116 = vunpack.c.l.b16 %v36
  %v117 = vunpack.c.l.b16 %v37
  %v118 = vunpack.c.l.b16 %v38
  %v119 = vunpack.c.l.b16 %v39
  %v120 = vunpack.c.l.b16 %v40
  %v121 = vunpack.c.l.b16 %v41
  %v122 = vunpack.c.l.b16 %v42
  %v123 = vunpack.c.l.b16 %v43
  %v124 = vpack.c.b16 %v109, %v108
  %v125 = vpack.c.b16 %v111, %v110
  %v126 = vpack.c.b16 %v113, %v112
  %v127 = vpack.c.b16 %v115, %v114
  %v128 = vpack.c.b16 %v117, %v116
  %v129 = vpack.c.b16 %v119, %v118
  %v130 = vpack.c.b16 %v121, %v120
  %v131 = vpack.c.b16 %v123, %v122
  %140 = vmatprep.subr.bf16.mxu0 0
  %141 = vmatpush1.bf16.msra.mxu0 %v124
  %142 = vmatprep.subr.bf16.mxu0 0
  %143 = vmatpush1.bf16.msra.mxu0 %v125
  %144 = vmatprep.subr.bf16.mxu0 0
  %145 = vmatpush1.bf16.msra.mxu0 %v126
  %146 = vmatprep.subr.bf16.mxu0 0
  %147 = vmatpush1.bf16.msra.mxu0 %v127
  %148 = vmatprep.subr.bf16.mxu0 0
  %149 = vmatpush1.bf16.msra.mxu0 %v128
  %150 = vmatprep.subr.bf16.mxu0 0
  %151 = vmatpush1.bf16.msra.mxu0 %v129
  %152 = vmatprep.subr.bf16.mxu0 0
  %153 = vmatpush1.bf16.msra.mxu0 %v130
  %154 = vmatprep.subr.bf16.mxu0 0
  %155 = vmatpush1.bf16.msra.mxu0 %v131
  %156 = vmatprep.subr.bf16.mxu0 0
  %157 = vmatpush1.bf16.msra.mxu0 0
  %158 = vmatprep.subr.bf16.mxu0 0
  %159 = vmatpush1.bf16.msra.mxu0 0
  %160 = vmatprep.subr.bf16.mxu0 0
  %161 = vmatpush1.bf16.msra.mxu0 0
  %162 = vmatprep.subr.bf16.mxu0 0
  %163 = vmatpush1.bf16.msra.mxu0 0
  %164 = vmatprep.subr.bf16.mxu0 0
  %165 = vmatpush1.bf16.msra.mxu0 0
  %166 = vmatprep.subr.bf16.mxu0 0
  %167 = vmatpush1.bf16.msra.mxu0 0
  %168 = vmatprep.subr.bf16.mxu0 0
  %169 = vmatpush1.bf16.msra.mxu0 0
  %170 = vmatprep.subr.bf16.mxu0 0
  %171 = vmatpush1.bf16.msra.mxu0 0
  %172 = vmatprep.mubr.bf16.mxu0 0
  %173 = vmatmul.mubr.bf16.gmra.mrb[0].mxu0 %v76
  %v174 = vpop.f32.mrb[0].mxu0
  %v175 = vadd.f32 0.0, %v174
  %v176 = vpop.f32.mrb[0].mxu0
  %v177 = vpop.f32.mrb[0].mxu0
  %v178 = vadd.f32 0.0, %v177
  %v179 = vpop.f32.mrb[0].mxu0
  %180 = vmatprep.mubr.bf16.mxu0 0
  %181 = vmatmul.mubr.bf16.gmra.mrb[0].mxu0 %v77
  %v182 = vpop.f32.mrb[0].mxu0
  %v183 = vadd.f32 0.0, %v182
  %v184 = vpop.f32.mrb[0].mxu0
  %v185 = vpop.f32.mrb[0].mxu0
  %v186 = vadd.f32 0.0, %v185
  %v187 = vpop.f32.mrb[0].mxu0
  %188 = vmatprep.mubr.bf16.mxu0 0
  %189 = vmatmul.mubr.bf16.gmra.mrb[0].mxu0 %v78
  %v190 = vpop.f32.mrb[0].mxu0
  %v191 = vadd.f32 0.0, %v190
  %v192 = vpop.f32.mrb[0].mxu0
  %v193 = vpop.f32.mrb[0].mxu0
  %v194 = vadd.f32 0.0, %v193
  %v195 = vpop.f32.mrb[0].mxu0
  %196 = vmatprep.mubr.bf16.mxu0 0
  %197 = vmatmul.mubr.bf16.gmra.mrb[0].mxu0 %v79
  %v198 = vpop.f32.mrb[0].mxu0
  %v199 = vadd.f32 0.0, %v198
  %v200 = vpop.f32.mrb[0].mxu0
  %v201 = vpop.f32.mrb[0].mxu0
  %v202 = vadd.f32 0.0, %v201
  %v203 = vpop.f32.mrb[0].mxu0
  %204 = vmatprep.mubr.bf16.mxu0 0
  %205 = vmatmul.mubr.bf16.gmra.mrb[0].mxu0 %v80
  %v206 = vpop.f32.mrb[0].mxu0
  %v207 = vadd.f32 0.0, %v206
  %v208 = vpop.f32.mrb[0].mxu0
  %v209 = vpop.f32.mrb[0].mxu0
  %v210 = vadd.f32 0.0, %v209
  %v211 = vpop.f32.mrb[0].mxu0
  %212 = vmatprep.mubr.bf16.mxu0 0
  %213 = vmatmul.mubr.bf16.gmra.mrb[0].mxu0 %v81
  %v214 = vpop.f32.mrb[0].mxu0
  %v215 = vadd.f32 0.0, %v214
  %v216 = vpop.f32.mrb[0].mxu0
  %v217 = vpop.f32.mrb[0].mxu0
  %v218 = vadd.f32 0.0, %v217
  %v219 = vpop.f32.mrb[0].mxu0
  %220 = vmatprep.mubr.bf16.mxu0 0
  %221 = vmatmul.mubr.bf16.gmra.mrb[0].mxu0 %v82
  %v222 = vpop.f32.mrb[0].mxu0
  %v223 = vadd.f32 0.0, %v222
  %v224 = vpop.f32.mrb[0].mxu0
  %v225 = vpop.f32.mrb[0].mxu0
  %v226 = vadd.f32 0.0, %v225
  %v227 = vpop.f32.mrb[0].mxu0
  %228 = vmatprep.mubr.bf16.mxu0 0
  %229 = vmatmul.mubr.bf16.gmra.mrb[0].mxu0 %v83
  %v230 = vpop.f32.mrb[0].mxu0
  %v231 = vadd.f32 0.0, %v230
  %v232 = vpop.f32.mrb[0].mxu0
  %v233 = vpop.f32.mrb[0].mxu0
  %v234 = vadd.f32 0.0, %v233
  %v235 = vpop.f32.mrb[0].mxu0
  %236 = vdwg.mxu0
  %237 = vst [vmem:[%s2] sm:$0xff] %v175
  %238 = vst [vmem:[%s2 + $0x8] sm:$0xff] %v178
  %239 = vst [vmem:[%s2 + $0x10] sm:$0xff] %v183
  %240 = vst [vmem:[%s2 + $0x18] sm:$0xff] %v186
  %241 = vst [vmem:[%s2 + $0x20] sm:$0xff] %v191
  %242 = vst [vmem:[%s2 + $0x28] sm:$0xff] %v194
  %243 = vst [vmem:[%s2 + $0x30] sm:$0xff] %v199
  %244 = vst [vmem:[%s2 + $0x38] sm:$0xff] %v202
  %245 = vst [vmem:[%s2 + $0x40] sm:$0xff] %v207
  %246 = vst [vmem:[%s2 + $0x48] sm:$0xff] %v210
  %247 = vst [vmem:[%s2 + $0x50] sm:$0xff] %v215
  %248 = vst [vmem:[%s2 + $0x58] sm:$0xff] %v218
  %249 = vst [vmem:[%s2 + $0x60] sm:$0xff] %v223
  %250 = vst [vmem:[%s2 + $0x68] sm:$0xff] %v226
  %251 = vst [vmem:[%s2 + $0x70] sm:$0xff] %v231
  %252 = vst [vmem:[%s2 + $0x78] sm:$0xff] %v234
  // Predicated region
  $region10: #{run.2} parent=0 // pred_check
    _
  $region11: #{run.2} parent=0 // pred_check_branch
    %254 = sbr.rel (0) target = $region13
  $region12: #{run.2} parent=0 // pred_region
    _
  $region13: #{run.2} parent=0 // pred_fallthru
    _
  // Predicated region
  $region14: #{run.2} parent=0 // pred_check
    _
  $region15: #{run.2} parent=0 // pred_check_branch
    %256 = sbr.rel (0) target = $region17
  $region16: #{run.2} parent=0 // pred_region
    _
  $region17: #{run.2} parent=0 // pred_fallthru
    _

// kernel: run.3
$region0: #{run.3}
  #allocation0 [shape = 'u32[]', space=smem, size = 0x4, offset = 0x4, fixed_abs, tag = 'smem constant byte address 0x4 - core index']
  #allocation1 [shape = 'u32[144,128]{1,0:T(1,128)}', space=vmem, size = 0x12000, scoped, tag = 'internal scratch']
  %s0 = inlined_call_operand.vmem [shape: bf16[16,3456], index: 0, kind: input, shape index: {}]
  %s1 = inlined_call_operand.vmem [shape: bf16[3456,128], index: 1, kind: input, shape index: {}]
  %s2 = inlined_call_operand.vmem [shape: f32[16,128], index: 2, kind: output, shape index: {}]
  %s3 = sld [smem:[#allocation0]]
  $region18: #{run.3} parent=0
    _
  %s5 = ssub.s32 1, %s3
  %s6 = scalar_select 0, %s5, %s3
  // Predicated region
  $region2: #{run.3} parent=0 // pred_check
    _
  $region3: #{run.3} parent=0 // pred_check_branch
    %8 = sbr.rel (0) target = $region5
  $region4: #{run.3} parent=0 // pred_region
    _
  $region5: #{run.3} parent=0 // pred_fallthru
    _
  // Predicated region
  $region6: #{run.3} parent=0 // pred_check
    _
  $region7: #{run.3} parent=0 // pred_check_branch
    %10 = sbr.rel (0) target = $region9
  $region8: #{run.3} parent=0 // pred_region
    _
  $region9: #{run.3} parent=0 // pred_fallthru
    _
  %v12 = vld [vmem:[%s0] sm:$0xff]
  %v13 = vld [vmem:[%s0 + $0x8] sm:$0xff]
  %v14 = vld [vmem:[%s0 + $0x10] sm:$0xff]
  %v15 = vld [vmem:[%s0 + $0x18] sm:$0xff]
  %v16 = vld [vmem:[%s0 + $0x20] sm:$0xff]
  %v17 = vld [vmem:[%s0 + $0x28] sm:$0xff]
  %v18 = vld [vmem:[%s0 + $0x30] sm:$0xff]
  %v19 = vld [vmem:[%s0 + $0x38] sm:$0xff]
  %v20 = vld [vmem:[%s0 + $0x40] sm:$0xff]
  %v21 = vld [vmem:[%s0 + $0x48] sm:$0xff]
  %v22 = vld [vmem:[%s0 + $0x50] sm:$0xff]
  %v23 = vld [vmem:[%s0 + $0x58] sm:$0xff]
  %v24 = vld [vmem:[%s0 + $0x60] sm:$0xff]
  %v25 = vld [vmem:[%s0 + $0x68] sm:$0xf]
  %v26 = vld [vmem:[%s0 + $0x6c] sm:$0xff]
  %v27 = vld [vmem:[%s0 + $0x74] sm:$0xff]
  %v28 = vld [vmem:[%s0 + $0x7c] sm:$0xff]
  %v29 = vld [vmem:[%s0 + $0x84] sm:$0xff]
  %v30 = vld [vmem:[%s0 + $0x8c] sm:$0xff]
  %v31 = vld [vmem:[%s0 + $0x94] sm:$0xff]
  %v32 = vld [vmem:[%s0 + $0x9c] sm:$0xff]
  %v33 = vld [vmem:[%s0 + $0xa4] sm:$0xff]
  %v34 = vld [vmem:[%s0 + $0xac] sm:$0xff]
  %v35 = vld [vmem:[%s0 + $0xb4] sm:$0xff]
  %v36 = vld [vmem:[%s0 + $0xbc] sm:$0xff]
  %v37 = vld [vmem:[%s0 + $0xc4] sm:$0xff]
  %v38 = vld [vmem:[%s0 + $0xcc] sm:$0xff]
  %v39 = vld [vmem:[%s0 + $0xd4] sm:$0xf]
  %v40 = vld [vmem:[%s1] sm:$0xf]
  %v41 = vld [vmem:[%s1 + $0x4] sm:$0xf]
  %v42 = vld [vmem:[%s1 + $0x8] sm:$0xf]
  %v43 = vld [vmem:[%s1 + $0xc] sm:$0xf]
  %v44 = vld [vmem:[%s1 + $0x10] sm:$0xf]
  %v45 = vld [vmem:[%s1 + $0x14] sm:$0xf]
  %v46 = vld [vmem:[%s1 + $0x18] sm:$0xf]
  %v47 = vld [vmem:[%s1 + $0x1c] sm:$0xf]
  %v48 = vld [vmem:[%s1 + $0x20] sm:$0xf]
  %v49 = vld [vmem:[%s1 + $0x24] sm:$0xf]
  %v50 = vld [vmem:[%s1 + $0x28] sm:$0xf]
  %v51 = vld [vmem:[%s1 + $0x2c] sm:$0xf]
  %v52 = vld [vmem:[%s1 + $0x30] sm:$0xf]
  %v53 = vld [vmem:[%s1 + $0x34] sm:$0xf]
  %v54 = vld [vmem:[%s1 + $0x38] sm:$0xf]
  %v55 = vld [vmem:[%s1 + $0x3c] sm:$0xf]
  %v56 = vld [vmem:[%s1 + $0x40] sm:$0xf]
  %v57 = vld [vmem:[%s1 + $0x44] sm:$0xf]
  %v58 = vld [vmem:[%s1 + $0x48] sm:$0xf]
  %v59 = vld [vmem:[%s1 + $0x4c] sm:$0xf]
  %v60 = vld [vmem:[%s1 + $0x50] sm:$0xf]
  %v61 = vld [vmem:[%s1 + $0x54] sm:$0xf]
  %v62 = vld [vmem:[%s1 + $0x58] sm:$0xf]
  %v63 = vld [vmem:[%s1 + $0x5c] sm:$0xf]
  %v64 = vld [vmem:[%s1 + $0x60] sm:$0xf]
  %v65 = vld [vmem:[%s1 + $0x64] sm:$0xf]
  %v66 = vld [vmem:[%s1 + $0x68] sm:$0xf]
  %v67 = vld [vmem:[%s1 + $0x6c] sm:$0xf]
  %v68 = vld [vmem:[%s1 + $0x70] sm:$0xf]
  %v69 = vld [vmem:[%s1 + $0x74] sm:$0xf]
  %v70 = vld [vmem:[%s1 + $0x78] sm:$0xf]
  %v71 = vld [vmem:[%s1 + $0x7c] sm:$0xf]
  %v72 = vld [vmem:[%s1 + $0x80] sm:$0xf]
  %v73 = vld [vmem:[%s1 + $0x84] sm:$0xf]
  %v74 = vld [vmem:[%s1 + $0x88] sm:$0xf]
  %v75 = vld [vmem:[%s1 + $0x8c] sm:$0xf]
  %v76 = vld [vmem:[%s1 + $0x90] sm:$0xf]
  %v77 = vld [vmem:[%s1 + $0x94] sm:$0xf]
  %v78 = vld [vmem:[%s1 + $0x98] sm:$0xf]
  %v79 = vld [vmem:[%s1 + $0x9c] sm:$0xf]
  %v80 = vld [vmem:[%s1 + $0xa0] sm:$0xf]
  %v81 = vld [vmem:[%s1 + $0xa4] sm:$0xf]
  %v82 = vld [vmem:[%s1 + $0xa8] sm:$0xf]
  %v83 = vld [vmem:[%s1 + $0xac] sm:$0xf]
  %v84 = vld [vmem:[%s1 + $0xb0] sm:$0xf]
  %v85 = vld [vmem:[%s1 + $0xb4] sm:$0xf]
  %v86 = vld [vmem:[%s1 + $0xb8] sm:$0xf]
  %v87 = vld [vmem:[%s1 + $0xbc] sm:$0xf]
  %v88 = vld [vmem:[%s1 + $0xc0] sm:$0xf]
  %v89 = vld [vmem:[%s1 + $0xc4] sm:$0xf]
  %v90 = vld [vmem:[%s1 + $0xc8] sm:$0xf]
  %v91 = vld [vmem:[%s1 + $0xcc] sm:$0xf]
  %v92 = vld [vmem:[%s1 + $0xd0] sm:$0xf]
  %v93 = vld [vmem:[%s1 + $0xd4] sm:$0xf]
  %v94 = vld [vmem:[%s1 + $0xd8] sm:$0xf]
  %v95 = vld [vmem:[%s1 + $0xdc] sm:$0xf]
  %v96 = vld [vmem:[%s1 + $0xe0] sm:$0xf]
  %v97 = vld [vmem:[%s1 + $0xe4] sm:$0xf]
  %v98 = vld [vmem:[%s1 + $0xe8] sm:$0xf]
  %v99 = vld [vmem:[%s1 + $0xec] sm:$0xf]
  %v100 = vld [vmem:[%s1 + $0xf0] sm:$0xf]
  %v101 = vld [vmem:[%s1 + $0xf4] sm:$0xf]
  %v102 = vld [vmem:[%s1 + $0xf8] sm:$0xf]
  %v103 = vld [vmem:[%s1 + $0xfc] sm:$0xf]
  %v104 = vld [vmem:[%s1 + $0x100] sm:$0xf]
  %v105 = vld [vmem:[%s1 + $0x104] sm:$0xf]
  %v106 = vld [vmem:[%s1 + $0x108] sm:$0xf]
  %v107 = vld [vmem:[%s1 + $0x10c] sm:$0xf]
  %v108 = vld [vmem:[%s1 + $0x110] sm:$0xf]
  %v109 = vld [vmem:[%s1 + $0x114] sm:$0xf]
  %v110 = vld [vmem:[%s1 + $0x118] sm:$0xf]
  %v111 = vld [vmem:[%s1 + $0x11c] sm:$0xf]
  %v112 = vld [vmem:[%s1 + $0x120] sm:$0xf]
  %v113 = vld [vmem:[%s1 + $0x124] sm:$0xf]
  %v114 = vld [vmem:[%s1 + $0x128] sm:$0xf]
  %v115 = vld [vmem:[%s1 + $0x12c] sm:$0xf]
  %v116 = vld [vmem:[%s1 + $0x130] sm:$0xf]
  %v117 = vld [vmem:[%s1 + $0x134] sm:$0xf]
  %v118 = vld [vmem:[%s1 + $0x138] sm:$0xf]
  %v119 = vld [vmem:[%s1 + $0x13c] sm:$0xf]
  %v120 = vld [vmem:[%s1 + $0x140] sm:$0xf]
  %v121 = vld [vmem:[%s1 + $0x144] sm:$0xf]
  %v122 = vld [vmem:[%s1 + $0x148] sm:$0xf]
  %v123 = vld [vmem:[%s1 + $0x14c] sm:$0xf]
  %v124 = vld [vmem:[%s1 + $0x150] sm:$0xf]
  %v125 = vld [vmem:[%s1 + $0x154] sm:$0xf]
  %v126 = vld [vmem:[%s1 + $0x158] sm:$0xf]
  %v127 = vld [vmem:[%s1 + $0x15c] sm:$0xf]
  %v128 = vld [vmem:[%s1 + $0x160] sm:$0xf]
  %v129 = vld [vmem:[%s1 + $0x164] sm:$0xf]
  %v130 = vld [vmem:[%s1 + $0x168] sm:$0xf]
  %v131 = vld [vmem:[%s1 + $0x16c] sm:$0xf]
  %v132 = vld [vmem:[%s1 + $0x170] sm:$0xf]
  %v133 = vld [vmem:[%s1 + $0x174] sm:$0xf]
  %v134 = vld [vmem:[%s1 + $0x178] sm:$0xf]
  %v135 = vld [vmem:[%s1 + $0x17c] sm:$0xf]
  %v136 = vld [vmem:[%s1 + $0x180] sm:$0xf]
  %v137 = vld [vmem:[%s1 + $0x184] sm:$0xf]
  %v138 = vld [vmem:[%s1 + $0x188] sm:$0xf]
  %v139 = vld [vmem:[%s1 + $0x18c] sm:$0xf]
  %v140 = vld [vmem:[%s1 + $0x190] sm:$0xf]
  %v141 = vld [vmem:[%s1 + $0x194] sm:$0xf]
  %v142 = vld [vmem:[%s1 + $0x198] sm:$0xf]
  %v143 = vld [vmem:[%s1 + $0x19c] sm:$0xf]
  %v144 = vld [vmem:[%s1 + $0x1a0] sm:$0xf]
  %v145 = vld [vmem:[%s1 + $0x1a4] sm:$0xf]
  %v146 = vld [vmem:[%s1 + $0x1a8] sm:$0xf]
  %v147 = vld [vmem:[%s1 + $0x1ac] sm:$0xf]
  %v148 = vld [vmem:[%s1 + $0x1b0] sm:$0xf]
  %v149 = vld [vmem:[%s1 + $0x1b4] sm:$0xf]
  %v150 = vld [vmem:[%s1 + $0x1b8] sm:$0xf]
  %v151 = vld [vmem:[%s1 + $0x1bc] sm:$0xf]
  %v152 = vld [vmem:[%s1 + $0x1c0] sm:$0xf]
  %v153 = vld [vmem:[%s1 + $0x1c4] sm:$0xf]
  %v154 = vld [vmem:[%s1 + $0x1c8] sm:$0xf]
  %v155 = vld [vmem:[%s1 + $0x1cc] sm:$0xf]
  %v156 = vld [vmem:[%s1 + $0x1d0] sm:$0xf]
  %v157 = vld [vmem:[%s1 + $0x1d4] sm:$0xf]
  %v158 = vld [vmem:[%s1 + $0x1d8] sm:$0xf]
  %v159 = vld [vmem:[%s1 + $0x1dc] sm:$0xf]
  %v160 = vld [vmem:[%s1 + $0x1e0] sm:$0xf]
  %v161 = vld [vmem:[%s1 + $0x1e4] sm:$0xf]
  %v162 = vld [vmem:[%s1 + $0x1e8] sm:$0xf]
  %v163 = vld [vmem:[%s1 + $0x1ec] sm:$0xf]
  %v164 = vld [vmem:[%s1 + $0x1f0] sm:$0xf]
  %v165 = vld [vmem:[%s1 + $0x1f4] sm:$0xf]
  %v166 = vld [vmem:[%s1 + $0x1f8] sm:$0xf]
  %v167 = vld [vmem:[%s1 + $0x1fc] sm:$0xf]
  %v168 = vld [vmem:[%s1 + $0x200] sm:$0xf]
  %v169 = vld [vmem:[%s1 + $0x204] sm:$0xf]
  %v170 = vld [vmem:[%s1 + $0x208] sm:$0xf]
  %v171 = vld [vmem:[%s1 + $0x20c] sm:$0xf]
  %v172 = vld [vmem:[%s1 + $0x210] sm:$0xf]
  %v173 = vld [vmem:[%s1 + $0x214] sm:$0xf]
  %v174 = vld [vmem:[%s1 + $0x218] sm:$0xf]
  %v175 = vld [vmem:[%s1 + $0x21c] sm:$0xf]
  %v176 = vld [vmem:[%s1 + $0x220] sm:$0xf]
  %v177 = vld [vmem:[%s1 + $0x224] sm:$0xf]
  %v178 = vld [vmem:[%s1 + $0x228] sm:$0xf]
  %v179 = vld [vmem:[%s1 + $0x22c] sm:$0xf]
  %v180 = vld [vmem:[%s1 + $0x230] sm:$0xf]
  %v181 = vld [vmem:[%s1 + $0x234] sm:$0xf]
  %v182 = vld [vmem:[%s1 + $0x238] sm:$0xf]
  %v183 = vld [vmem:[%s1 + $0x23c] sm:$0xf]
  %v184 = vld [vmem:[%s1 + $0x240] sm:$0xf]
  %v185 = vld [vmem:[%s1 + $0x244] sm:$0xf]
  %v186 = vld [vmem:[%s1 + $0x248] sm:$0xf]
  %v187 = vld [vmem:[%s1 + $0x24c] sm:$0xf]
  %v188 = vld [vmem:[%s1 + $0x250] sm:$0xf]
  %v189 = vld [vmem:[%s1 + $0x254] sm:$0xf]
  %v190 = vld [vmem:[%s1 + $0x258] sm:$0xf]
  %v191 = vld [vmem:[%s1 + $0x25c] sm:$0xf]
  %v192 = vld [vmem:[%s1 + $0x260] sm:$0xf]
  %v193 = vld [vmem:[%s1 + $0x264] sm:$0xf]
  %v194 = vld [vmem:[%s1 + $0x268] sm:$0xf]
  %v195 = vld [vmem:[%s1 + $0x26c] sm:$0xf]
  %v196 = vld [vmem:[%s1 + $0x270] sm:$0xf]
  %v197 = vld [vmem:[%s1 + $0x274] sm:$0xf]
  %v198 = vld [vmem:[%s1 + $0x278] sm:$0xf]
  %v199 = vld [vmem:[%s1 + $0x27c] sm:$0xf]
  %v200 = vld [vmem:[%s1 + $0x280] sm:$0xf]
  %v201 = vld [vmem:[%s1 + $0x284] sm:$0xf]
  %v202 = vld [vmem:[%s1 + $0x288] sm:$0xf]
  %v203 = vld [vmem:[%s1 + $0x28c] sm:$0xf]
  %v204 = vld [vmem:[%s1 + $0x290] sm:$0xf]
  %v205 = vld [vmem:[%s1 + $0x294] sm:$0xf]
  %v206 = vld [vmem:[%s1 + $0x298] sm:$0xf]
  %v207 = vld [vmem:[%s1 + $0x29c] sm:$0xf]
  %v208 = vld [vmem:[%s1 + $0x2a0] sm:$0xf]
  %v209 = vld [vmem:[%s1 + $0x2a4] sm:$0xf]
  %v210 = vld [vmem:[%s1 + $0x2a8] sm:$0xf]
  %v211 = vld [vmem:[%s1 + $0x2ac] sm:$0xf]
  %v212 = vld [vmem:[%s1 + $0x2b0] sm:$0xf]
  %v213 = vld [vmem:[%s1 + $0x2b4] sm:$0xf]
  %v214 = vld [vmem:[%s1 + $0x2b8] sm:$0xf]
  %v215 = vld [vmem:[%s1 + $0x2bc] sm:$0xf]
  %v216 = vld [vmem:[%s1 + $0x2c0] sm:$0xf]
  %v217 = vld [vmem:[%s1 + $0x2c4] sm:$0xf]
  %v218 = vld [vmem:[%s1 + $0x2c8] sm:$0xf]
  %v219 = vld [vmem:[%s1 + $0x2cc] sm:$0xf]
  %v220 = vld [vmem:[%s1 + $0x2d0] sm:$0xf]
  %v221 = vld [vmem:[%s1 + $0x2d4] sm:$0xf]
  %v222 = vld [vmem:[%s1 + $0x2d8] sm:$0xf]
  %v223 = vld [vmem:[%s1 + $0x2dc] sm:$0xf]
  %v224 = vld [vmem:[%s1 + $0x2e0] sm:$0xf]
  %v225 = vld [vmem:[%s1 + $0x2e4] sm:$0xf]
  %v226 = vld [vmem:[%s1 + $0x2e8] sm:$0xf]
  %v227 = vld [vmem:[%s1 + $0x2ec] sm:$0xf]
  %v228 = vld [vmem:[%s1 + $0x2f0] sm:$0xf]
  %v229 = vld [vmem:[%s1 + $0x2f4] sm:$0xf]
  %v230 = vld [vmem:[%s1 + $0x2f8] sm:$0xf]
  %v231 = vld [vmem:[%s1 + $0x2fc] sm:$0xf]
  %v232 = vld [vmem:[%s1 + $0x300] sm:$0xf]
  %v233 = vld [vmem:[%s1 + $0x304] sm:$0xf]
  %v234 = vld [vmem:[%s1 + $0x308] sm:$0xf]
  %v235 = vld [vmem:[%s1 + $0x30c] sm:$0xf]
  %v236 = vld [vmem:[%s1 + $0x310] sm:$0xf]
  %v237 = vld [vmem:[%s1 + $0x314] sm:$0xf]
  %v238 = vld [vmem:[%s1 + $0x318] sm:$0xf]
  %v239 = vld [vmem:[%s1 + $0x31c] sm:$0xf]
  %v240 = vld [vmem:[%s1 + $0x320] sm:$0xf]
  %v241 = vld [vmem:[%s1 + $0x324] sm:$0xf]
  %v242 = vld [vmem:[%s1 + $0x328] sm:$0xf]
  %v243 = vld [vmem:[%s1 + $0x32c] sm:$0xf]
  %v244 = vld [vmem:[%s1 + $0x330] sm:$0xf]
  %v245 = vld [vmem:[%s1 + $0x334] sm:$0xf]
  %v246 = vld [vmem:[%s1 + $0x338] sm:$0xf]
  %v247 = vld [vmem:[%s1 + $0x33c] sm:$0xf]
  %v248 = vld [vmem:[%s1 + $0x340] sm:$0xf]
  %v249 = vld [vmem:[%s1 + $0x344] sm:$0xf]
  %v250 = vld [vmem:[%s1 + $0x348] sm:$0xf]
  %v251 = vld [vmem:[%s1 + $0x34c] sm:$0xf]
  %v252 = vld [vmem:[%s1 + $0x350] sm:$0xf]
  %v253 = vld [vmem:[%s1 + $0x354] sm:$0xf]
  %v254 = vld [vmem:[%s1 + $0x358] sm:$0xf]
  %v255 = vld [vmem:[%s1 + $0x35c] sm:$0xf]
  %v256 = vld [vmem:[%s1 + $0x360] sm:$0xf]
  %v257 = vld [vmem:[%s1 + $0x364] sm:$0xf]
  %v258 = vld [vmem:[%s1 + $0x368] sm:$0xf]
  %v259 = vld [vmem:[%s1 + $0x36c] sm:$0xf]
  %v260 = vld [vmem:[%s1 + $0x370] sm:$0xf]
  %v261 = vld [vmem:[%s1 + $0x374] sm:$0xf]
  %v262 = vld [vmem:[%s1 + $0x378] sm:$0xf]
  %v263 = vld [vmem:[%s1 + $0x37c] sm:$0xf]
  %v264 = vld [vmem:[%s1 + $0x380] sm:$0xf]
  %v265 = vld [vmem:[%s1 + $0x384] sm:$0xf]
  %v266 = vld [vmem:[%s1 + $0x388] sm:$0xf]
  %v267 = vld [vmem:[%s1 + $0x38c] sm:$0xf]
  %v268 = vld [vmem:[%s1 + $0x390] sm:$0xf]
  %v269 = vld [vmem:[%s1 + $0x394] sm:$0xf]
  %v270 = vld [vmem:[%s1 + $0x398] sm:$0xf]
  %v271 = vld [vmem:[%s1 + $0x39c] sm:$0xf]
  %v272 = vld [vmem:[%s1 + $0x3a0] sm:$0xf]
  %v273 = vld [vmem:[%s1 + $0x3a4] sm:$0xf]
  %v274 = vld [vmem:[%s1 + $0x3a8] sm:$0xf]
  %v275 = vld [vmem:[%s1 + $0x3ac] sm:$0xf]
  %v276 = vld [vmem:[%s1 + $0x3b0] sm:$0xf]
  %v277 = vld [vmem:[%s1 + $0x3b4] sm:$0xf]
  %v278 = vld [vmem:[%s1 + $0x3b8] sm:$0xf]
  %v279 = vld [vmem:[%s1 + $0x3bc] sm:$0xf]
  %v280 = vld [vmem:[%s1 + $0x3c0] sm:$0xf]
  %v281 = vld [vmem:[%s1 + $0x3c4] sm:$0xf]
  %v282 = vld [vmem:[%s1 + $0x3c8] sm:$0xf]
  %v283 = vld [vmem:[%s1 + $0x3cc] sm:$0xf]
  %v284 = vld [vmem:[%s1 + $0x3d0] sm:$0xf]
  %v285 = vld [vmem:[%s1 + $0x3d4] sm:$0xf]
  %v286 = vld [vmem:[%s1 + $0x3d8] sm:$0xf]
  %v287 = vld [vmem:[%s1 + $0x3dc] sm:$0xf]
  %v288 = vld [vmem:[%s1 + $0x3e0] sm:$0xf]
  %v289 = vld [vmem:[%s1 + $0x3e4] sm:$0xf]
  %v290 = vld [vmem:[%s1 + $0x3e8] sm:$0xf]
  %v291 = vld [vmem:[%s1 + $0x3ec] sm:$0xf]
  %v292 = vld [vmem:[%s1 + $0x3f0] sm:$0xf]
  %v293 = vld [vmem:[%s1 + $0x3f4] sm:$0xf]
  %v294 = vld [vmem:[%s1 + $0x3f8] sm:$0xf]
  %v295 = vld [vmem:[%s1 + $0x3fc] sm:$0xf]
  %v296 = vld [vmem:[%s1 + $0x400] sm:$0xf]
  %v297 = vld [vmem:[%s1 + $0x404] sm:$0xf]
  %v298 = vld [vmem:[%s1 + $0x408] sm:$0xf]
  %v299 = vld [vmem:[%s1 + $0x40c] sm:$0xf]
  %v300 = vld [vmem:[%s1 + $0x410] sm:$0xf]
  %v301 = vld [vmem:[%s1 + $0x414] sm:$0xf]
  %v302 = vld [vmem:[%s1 + $0x418] sm:$0xf]
  %v303 = vld [vmem:[%s1 + $0x41c] sm:$0xf]
  %v304 = vld [vmem:[%s1 + $0x420] sm:$0xf]
  %v305 = vld [vmem:[%s1 + $0x424] sm:$0xf]
  %v306 = vld [vmem:[%s1 + $0x428] sm:$0xf]
  %v307 = vld [vmem:[%s1 + $0x42c] sm:$0xf]
  %v308 = vld [vmem:[%s1 + $0x430] sm:$0xf]
  %v309 = vld [vmem:[%s1 + $0x434] sm:$0xf]
  %v310 = vld [vmem:[%s1 + $0x438] sm:$0xf]
  %v311 = vld [vmem:[%s1 + $0x43c] sm:$0xf]
  %v312 = vld [vmem:[%s1 + $0x440] sm:$0xf]
  %v313 = vld [vmem:[%s1 + $0x444] sm:$0xf]
  %v314 = vld [vmem:[%s1 + $0x448] sm:$0xf]
  %v315 = vld [vmem:[%s1 + $0x44c] sm:$0xf]
  %v316 = vld [vmem:[%s1 + $0x450] sm:$0xf]
  %v317 = vld [vmem:[%s1 + $0x454] sm:$0xf]
  %v318 = vld [vmem:[%s1 + $0x458] sm:$0xf]
  %v319 = vld [vmem:[%s1 + $0x45c] sm:$0xf]
  %v320 = vld [vmem:[%s1 + $0x460] sm:$0xf]
  %v321 = vld [vmem:[%s1 + $0x464] sm:$0xf]
  %v322 = vld [vmem:[%s1 + $0x468] sm:$0xf]
  %v323 = vld [vmem:[%s1 + $0x46c] sm:$0xf]
  %v324 = vld [vmem:[%s1 + $0x470] sm:$0xf]
  %v325 = vld [vmem:[%s1 + $0x474] sm:$0xf]
  %v326 = vld [vmem:[%s1 + $0x478] sm:$0xf]
  %v327 = vld [vmem:[%s1 + $0x47c] sm:$0xf]
  %v328 = vld [vmem:[%s1 + $0x480] sm:$0xf]
  %v329 = vld [vmem:[%s1 + $0x484] sm:$0xf]
  %v330 = vld [vmem:[%s1 + $0x488] sm:$0xf]
  %v331 = vld [vmem:[%s1 + $0x48c] sm:$0xf]
  %v332 = vld [vmem:[%s1 + $0x490] sm:$0xf]
  %v333 = vld [vmem:[%s1 + $0x494] sm:$0xf]
  %v334 = vld [vmem:[%s1 + $0x498] sm:$0xf]
  %v335 = vld [vmem:[%s1 + $0x49c] sm:$0xf]
  %v336 = vld [vmem:[%s1 + $0x4a0] sm:$0xf]
  %v337 = vld [vmem:[%s1 + $0x4a4] sm:$0xf]
  %v338 = vld [vmem:[%s1 + $0x4a8] sm:$0xf]
  %v339 = vld [vmem:[%s1 + $0x4ac] sm:$0xf]
  %v340 = vld [vmem:[%s1 + $0x4b0] sm:$0xf]
  %v341 = vld [vmem:[%s1 + $0x4b4] sm:$0xf]
  %v342 = vld [vmem:[%s1 + $0x4b8] sm:$0xf]
  %v343 = vld [vmem:[%s1 + $0x4bc] sm:$0xf]
  %v344 = vld [vmem:[%s1 + $0x4c0] sm:$0xf]
  %v345 = vld [vmem:[%s1 + $0x4c4] sm:$0xf]
  %v346 = vld [vmem:[%s1 + $0x4c8] sm:$0xf]
  %v347 = vld [vmem:[%s1 + $0x4cc] sm:$0xf]
  %v348 = vld [vmem:[%s1 + $0x4d0] sm:$0xf]
  %v349 = vld [vmem:[%s1 + $0x4d4] sm:$0xf]
  %v350 = vld [vmem:[%s1 + $0x4d8] sm:$0xf]
  %v351 = vld [vmem:[%s1 + $0x4dc] sm:$0xf]
  %v352 = vld [vmem:[%s1 + $0x4e0] sm:$0xf]
  %v353 = vld [vmem:[%s1 + $0x4e4] sm:$0xf]
  %v354 = vld [vmem:[%s1 + $0x4e8] sm:$0xf]
  %v355 = vld [vmem:[%s1 + $0x4ec] sm:$0xf]
  %v356 = vld [vmem:[%s1 + $0x4f0] sm:$0xf]
  %v357 = vld [vmem:[%s1 + $0x4f4] sm:$0xf]
  %v358 = vld [vmem:[%s1 + $0x4f8] sm:$0xf]
  %v359 = vld [vmem:[%s1 + $0x4fc] sm:$0xf]
  %v360 = vld [vmem:[%s1 + $0x500] sm:$0xf]
  %v361 = vld [vmem:[%s1 + $0x504] sm:$0xf]
  %v362 = vld [vmem:[%s1 + $0x508] sm:$0xf]
  %v363 = vld [vmem:[%s1 + $0x50c] sm:$0xf]
  %v364 = vld [vmem:[%s1 + $0x510] sm:$0xf]
  %v365 = vld [vmem:[%s1 + $0x514] sm:$0xf]
  %v366 = vld [vmem:[%s1 + $0x518] sm:$0xf]
  %v367 = vld [vmem:[%s1 + $0x51c] sm:$0xf]
  %v368 = vld [vmem:[%s1 + $0x520] sm:$0xf]
  %v369 = vld [vmem:[%s1 + $0x524] sm:$0xf]
  %v370 = vld [vmem:[%s1 + $0x528] sm:$0xf]
  %v371 = vld [vmem:[%s1 + $0x52c] sm:$0xf]
  %v372 = vld [vmem:[%s1 + $0x530] sm:$0xf]
  %v373 = vld [vmem:[%s1 + $0x534] sm:$0xf]
  %v374 = vld [vmem:[%s1 + $0x538] sm:$0xf]
  %v375 = vld [vmem:[%s1 + $0x53c] sm:$0xf]
  %v376 = vld [vmem:[%s1 + $0x540] sm:$0xf]
  %v377 = vld [vmem:[%s1 + $0x544] sm:$0xf]
  %v378 = vld [vmem:[%s1 + $0x548] sm:$0xf]
  %v379 = vld [vmem:[%s1 + $0x54c] sm:$0xf]
  %v380 = vld [vmem:[%s1 + $0x550] sm:$0xf]
  %v381 = vld [vmem:[%s1 + $0x554] sm:$0xf]
  %v382 = vld [vmem:[%s1 + $0x558] sm:$0xf]
  %v383 = vld [vmem:[%s1 + $0x55c] sm:$0xf]
  %v384 = vld [vmem:[%s1 + $0x560] sm:$0xf]
  %v385 = vld [vmem:[%s1 + $0x564] sm:$0xf]
  %v386 = vld [vmem:[%s1 + $0x568] sm:$0xf]
  %v387 = vld [vmem:[%s1 + $0x56c] sm:$0xf]
  %v388 = vld [vmem:[%s1 + $0x570] sm:$0xf]
  %v389 = vld [vmem:[%s1 + $0x574] sm:$0xf]
  %v390 = vld [vmem:[%s1 + $0x578] sm:$0xf]
  %v391 = vld [vmem:[%s1 + $0x57c] sm:$0xf]
  %v392 = vld [vmem:[%s1 + $0x580] sm:$0xf]
  %v393 = vld [vmem:[%s1 + $0x584] sm:$0xf]
  %v394 = vld [vmem:[%s1 + $0x588] sm:$0xf]
  %v395 = vld [vmem:[%s1 + $0x58c] sm:$0xf]
  %v396 = vld [vmem:[%s1 + $0x590] sm:$0xf]
  %v397 = vld [vmem:[%s1 + $0x594] sm:$0xf]
  %v398 = vld [vmem:[%s1 + $0x598] sm:$0xf]
  %v399 = vld [vmem:[%s1 + $0x59c] sm:$0xf]
  %v400 = vld [vmem:[%s1 + $0x5a0] sm:$0xf]
  %v401 = vld [vmem:[%s1 + $0x5a4] sm:$0xf]
  %v402 = vld [vmem:[%s1 + $0x5a8] sm:$0xf]
  %v403 = vld [vmem:[%s1 + $0x5ac] sm:$0xf]
  %v404 = vld [vmem:[%s1 + $0x5b0] sm:$0xf]
  %v405 = vld [vmem:[%s1 + $0x5b4] sm:$0xf]
  %v406 = vld [vmem:[%s1 + $0x5b8] sm:$0xf]
  %v407 = vld [vmem:[%s1 + $0x5bc] sm:$0xf]
  %v408 = vld [vmem:[%s1 + $0x5c0] sm:$0xf]
  %v409 = vld [vmem:[%s1 + $0x5c4] sm:$0xf]
  %v410 = vld [vmem:[%s1 + $0x5c8] sm:$0xf]
  %v411 = vld [vmem:[%s1 + $0x5cc] sm:$0xf]
  %v412 = vld [vmem:[%s1 + $0x5d0] sm:$0xf]
  %v413 = vld [vmem:[%s1 + $0x5d4] sm:$0xf]
  %v414 = vld [vmem:[%s1 + $0x5d8] sm:$0xf]
  %v415 = vld [vmem:[%s1 + $0x5dc] sm:$0xf]
  %v416 = vld [vmem:[%s1 + $0x5e0] sm:$0xf]
  %v417 = vld [vmem:[%s1 + $0x5e4] sm:$0xf]
  %v418 = vld [vmem:[%s1 + $0x5e8] sm:$0xf]
  %v419 = vld [vmem:[%s1 + $0x5ec] sm:$0xf]
  %v420 = vld [vmem:[%s1 + $0x5f0] sm:$0xf]
  %v421 = vld [vmem:[%s1 + $0x5f4] sm:$0xf]
  %v422 = vld [vmem:[%s1 + $0x5f8] sm:$0xf]
  %v423 = vld [vmem:[%s1 + $0x5fc] sm:$0xf]
  %v424 = vld [vmem:[%s1 + $0x600] sm:$0xf]
  %v425 = vld [vmem:[%s1 + $0x604] sm:$0xf]
  %v426 = vld [vmem:[%s1 + $0x608] sm:$0xf]
  %v427 = vld [vmem:[%s1 + $0x60c] sm:$0xf]
  %v428 = vld [vmem:[%s1 + $0x610] sm:$0xf]
  %v429 = vld [vmem:[%s1 + $0x614] sm:$0xf]
  %v430 = vld [vmem:[%s1 + $0x618] sm:$0xf]
  %v431 = vld [vmem:[%s1 + $0x61c] sm:$0xf]
  %v432 = vld [vmem:[%s1 + $0x620] sm:$0xf]
  %v433 = vld [vmem:[%s1 + $0x624] sm:$0xf]
  %v434 = vld [vmem:[%s1 + $0x628] sm:$0xf]
  %v435 = vld [vmem:[%s1 + $0x62c] sm:$0xf]
  %v436 = vld [vmem:[%s1 + $0x630] sm:$0xf]
  %v437 = vld [vmem:[%s1 + $0x634] sm:$0xf]
  %v438 = vld [vmem:[%s1 + $0x638] sm:$0xf]
  %v439 = vld [vmem:[%s1 + $0x63c] sm:$0xf]
  %v440 = vld [vmem:[%s1 + $0x640] sm:$0xf]
  %v441 = vld [vmem:[%s1 + $0x644] sm:$0xf]
  %v442 = vld [vmem:[%s1 + $0x648] sm:$0xf]
  %v443 = vld [vmem:[%s1 + $0x64c] sm:$0xf]
  %v444 = vld [vmem:[%s1 + $0x650] sm:$0xf]
  %v445 = vld [vmem:[%s1 + $0x654] sm:$0xf]
  %v446 = vld [vmem:[%s1 + $0x658] sm:$0xf]
  %v447 = vld [vmem:[%s1 + $0x65c] sm:$0xf]
  %v448 = vld [vmem:[%s1 + $0x660] sm:$0xf]
  %v449 = vld [vmem:[%s1 + $0x664] sm:$0xf]
  %v450 = vld [vmem:[%s1 + $0x668] sm:$0xf]
  %v451 = vld [vmem:[%s1 + $0x66c] sm:$0xf]
  %v452 = vld [vmem:[%s1 + $0x670] sm:$0xf]
  %v453 = vld [vmem:[%s1 + $0x674] sm:$0xf]
  %v454 = vld [vmem:[%s1 + $0x678] sm:$0xf]
  %v455 = vld [vmem:[%s1 + $0x67c] sm:$0xf]
  %v456 = vld [vmem:[%s1 + $0x680] sm:$0xf]
  %v457 = vld [vmem:[%s1 + $0x684] sm:$0xf]
  %v458 = vld [vmem:[%s1 + $0x688] sm:$0xf]
  %v459 = vld [vmem:[%s1 + $0x68c] sm:$0xf]
  %v460 = vld [vmem:[%s1 + $0x690] sm:$0xf]
  %v461 = vld [vmem:[%s1 + $0x694] sm:$0xf]
  %v462 = vld [vmem:[%s1 + $0x698] sm:$0xf]
  %v463 = vld [vmem:[%s1 + $0x69c] sm:$0xf]
  %v464 = vld [vmem:[%s1 + $0x6a0] sm:$0xf]
  %v465 = vld [vmem:[%s1 + $0x6a4] sm:$0xf]
  %v466 = vld [vmem:[%s1 + $0x6a8] sm:$0xf]
  %v467 = vld [vmem:[%s1 + $0x6ac] sm:$0xf]
  %v468 = vld [vmem:[%s1 + $0x6b0] sm:$0xf]
  %v469 = vld [vmem:[%s1 + $0x6b4] sm:$0xf]
  %v470 = vld [vmem:[%s1 + $0x6b8] sm:$0xf]
  %v471 = vld [vmem:[%s1 + $0x6bc] sm:$0xf]
  %v500 = vunpack.c.l.b16 %v12
  %v501 = vunpack.c.h.b16 %v12
  %v502 = vunpack.c.l.b16 %v13
  %v503 = vunpack.c.h.b16 %v13
  %v504 = vunpack.c.l.b16 %v14
  %v505 = vunpack.c.h.b16 %v14
  %v506 = vunpack.c.l.b16 %v15
  %v507 = vunpack.c.h.b16 %v15
  %v508 = vunpack.c.l.b16 %v16
  %v509 = vunpack.c.h.b16 %v16
  %v510 = vunpack.c.l.b16 %v17
  %v511 = vunpack.c.h.b16 %v17
  %v512 = vunpack.c.l.b16 %v18
  %v513 = vunpack.c.h.b16 %v18
  %v514 = vunpack.c.l.b16 %v19
  %v515 = vunpack.c.h.b16 %v19
  %v516 = vunpack.c.l.b16 %v20
  %v517 = vunpack.c.h.b16 %v20
  %v518 = vunpack.c.l.b16 %v21
  %v519 = vunpack.c.h.b16 %v21
  %v520 = vunpack.c.l.b16 %v22
  %v521 = vunpack.c.h.b16 %v22
  %v522 = vunpack.c.l.b16 %v23
  %v523 = vunpack.c.h.b16 %v23
  %v524 = vunpack.c.l.b16 %v24
  %v525 = vunpack.c.h.b16 %v24
  %v526 = vunpack.c.l.b16 %v25
  %v527 = vunpack.c.l.b16 %v26
  %v528 = vunpack.c.h.b16 %v26
  %v529 = vunpack.c.l.b16 %v27
  %v530 = vunpack.c.h.b16 %v27
  %v531 = vunpack.c.l.b16 %v28
  %v532 = vunpack.c.h.b16 %v28
  %v533 = vunpack.c.l.b16 %v29
  %v534 = vunpack.c.h.b16 %v29
  %v535 = vunpack.c.l.b16 %v30
  %v536 = vunpack.c.h.b16 %v30
  %v537 = vunpack.c.l.b16 %v31
  %v538 = vunpack.c.h.b16 %v31
  %v539 = vunpack.c.l.b16 %v32
  %v540 = vunpack.c.h.b16 %v32
  %v541 = vunpack.c.l.b16 %v33
  %v542 = vunpack.c.h.b16 %v33
  %v543 = vunpack.c.l.b16 %v34
  %v544 = vunpack.c.h.b16 %v34
  %v545 = vunpack.c.l.b16 %v35
  %v546 = vunpack.c.h.b16 %v35
  %v547 = vunpack.c.l.b16 %v36
  %v548 = vunpack.c.h.b16 %v36
  %v549 = vunpack.c.l.b16 %v37
  %v550 = vunpack.c.h.b16 %v37
  %v551 = vunpack.c.l.b16 %v38
  %v552 = vunpack.c.h.b16 %v38
  %v553 = vunpack.c.l.b16 %v39
  %v554 = vpack.c.b16 %v527, %v500
  %v555 = vpack.c.b16 %v528, %v501
  %v556 = vpack.c.b16 %v529, %v502
  %v557 = vpack.c.b16 %v530, %v503
  %v558 = vpack.c.b16 %v531, %v504
  %v559 = vpack.c.b16 %v532, %v505
  %v560 = vpack.c.b16 %v533, %v506
  %v561 = vpack.c.b16 %v534, %v507
  %v562 = vpack.c.b16 %v535, %v508
  %v563 = vpack.c.b16 %v536, %v509
  %v564 = vpack.c.b16 %v537, %v510
  %v565 = vpack.c.b16 %v538, %v511
  %v566 = vpack.c.b16 %v539, %v512
  %v567 = vpack.c.b16 %v540, %v513
  %v568 = vpack.c.b16 %v541, %v514
  %v569 = vpack.c.b16 %v542, %v515
  %v570 = vpack.c.b16 %v543, %v516
  %v571 = vpack.c.b16 %v544, %v517
  %v572 = vpack.c.b16 %v545, %v518
  %v573 = vpack.c.b16 %v546, %v519
  %v574 = vpack.c.b16 %v547, %v520
  %v575 = vpack.c.b16 %v548, %v521
  %v576 = vpack.c.b16 %v549, %v522
  %v577 = vpack.c.b16 %v550, %v523
  %v578 = vpack.c.b16 %v551, %v524
  %v579 = vpack.c.b16 %v552, %v525
  %v580 = vpack.c.b16 %v553, %v526
  %v1040 = vunpack.c.l.b16 %v40
  %v1041 = vunpack.c.l.b16 %v41
  %v1042 = vunpack.c.l.b16 %v42
  %v1043 = vunpack.c.l.b16 %v43
  %v1044 = vunpack.c.l.b16 %v44
  %v1045 = vunpack.c.l.b16 %v45
  %v1046 = vunpack.c.l.b16 %v46
  %v1047 = vunpack.c.l.b16 %v47
  %v1048 = vunpack.c.l.b16 %v48
  %v1049 = vunpack.c.l.b16 %v49
  %v1050 = vunpack.c.l.b16 %v50
  %v1051 = vunpack.c.l.b16 %v51
  %v1052 = vunpack.c.l.b16 %v52
  %v1053 = vunpack.c.l.b16 %v53
  %v1054 = vunpack.c.l.b16 %v54
  %v1055 = vunpack.c.l.b16 %v55
  %v1056 = vunpack.c.l.b16 %v56
  %v1057 = vunpack.c.l.b16 %v57
  %v1058 = vunpack.c.l.b16 %v58
  %v1059 = vunpack.c.l.b16 %v59
  %v1060 = vunpack.c.l.b16 %v60
  %v1061 = vunpack.c.l.b16 %v61
  %v1062 = vunpack.c.l.b16 %v62
  %v1063 = vunpack.c.l.b16 %v63
  %v1064 = vunpack.c.l.b16 %v64
  %v1065 = vunpack.c.l.b16 %v65
  %v1066 = vunpack.c.l.b16 %v66
  %v1067 = vunpack.c.l.b16 %v67
  %v1068 = vunpack.c.l.b16 %v68
  %v1069 = vunpack.c.l.b16 %v69
  %v1070 = vunpack.c.l.b16 %v70
  %v1071 = vunpack.c.l.b16 %v71
  %v1072 = vunpack.c.l.b16 %v72
  %v1073 = vunpack.c.l.b16 %v73
  %v1074 = vunpack.c.l.b16 %v74
  %v1075 = vunpack.c.l.b16 %v75
  %v1076 = vunpack.c.l.b16 %v76
  %v1077 = vunpack.c.l.b16 %v77
  %v1078 = vunpack.c.l.b16 %v78
  %v1079 = vunpack.c.l.b16 %v79
  %v1080 = vunpack.c.l.b16 %v80
  %v1081 = vunpack.c.l.b16 %v81
  %v1082 = vunpack.c.l.b16 %v82
  %v1083 = vunpack.c.l.b16 %v83
  %v1084 = vunpack.c.l.b16 %v84
  %v1085 = vunpack.c.l.b16 %v85
  %v1086 = vunpack.c.l.b16 %v86
  %v1087 = vunpack.c.l.b16 %v87
  %v1088 = vunpack.c.l.b16 %v88
  %v1089 = vunpack.c.l.b16 %v89
  %v1090 = vunpack.c.l.b16 %v90
  %v1091 = vunpack.c.l.b16 %v91
  %v1092 = vunpack.c.l.b16 %v92
  %v1093 = vunpack.c.l.b16 %v93
  %v1094 = vunpack.c.l.b16 %v94
  %v1095 = vunpack.c.l.b16 %v95
  %v1096 = vunpack.c.l.b16 %v96
  %v1097 = vunpack.c.l.b16 %v97
  %v1098 = vunpack.c.l.b16 %v98
  %v1099 = vunpack.c.l.b16 %v99
  %v1100 = vunpack.c.l.b16 %v100
  %v1101 = vunpack.c.l.b16 %v101
  %v1102 = vunpack.c.l.b16 %v102
  %v1103 = vunpack.c.l.b16 %v103
  %v1104 = vunpack.c.l.b16 %v104
  %v1105 = vunpack.c.l.b16 %v105
  %v1106 = vunpack.c.l.b16 %v106
  %v1107 = vunpack.c.l.b16 %v107
  %v1108 = vunpack.c.l.b16 %v108
  %v1109 = vunpack.c.l.b16 %v109
  %v1110 = vunpack.c.l.b16 %v110
  %v1111 = vunpack.c.l.b16 %v111
  %v1112 = vunpack.c.l.b16 %v112
  %v1113 = vunpack.c.l.b16 %v113
  %v1114 = vunpack.c.l.b16 %v114
  %v1115 = vunpack.c.l.b16 %v115
  %v1116 = vunpack.c.l.b16 %v116
  %v1117 = vunpack.c.l.b16 %v117
  %v1118 = vunpack.c.l.b16 %v118
  %v1119 = vunpack.c.l.b16 %v119
  %v1120 = vunpack.c.l.b16 %v120
  %v1121 = vunpack.c.l.b16 %v121
  %v1122 = vunpack.c.l.b16 %v122
  %v1123 = vunpack.c.l.b16 %v123
  %v1124 = vunpack.c.l.b16 %v124
  %v1125 = vunpack.c.l.b16 %v125
  %v1126 = vunpack.c.l.b16 %v126
  %v1127 = vunpack.c.l.b16 %v127
  %v1128 = vunpack.c.l.b16 %v128
  %v1129 = vunpack.c.l.b16 %v129
  %v1130 = vunpack.c.l.b16 %v130
  %v1131 = vunpack.c.l.b16 %v131
  %v1132 = vunpack.c.l.b16 %v132
  %v1133 = vunpack.c.l.b16 %v133
  %v1134 = vunpack.c.l.b16 %v134
  %v1135 = vunpack.c.l.b16 %v135
  %v1136 = vunpack.c.l.b16 %v136
  %v1137 = vunpack.c.l.b16 %v137
  %v1138 = vunpack.c.l.b16 %v138
  %v1139 = vunpack.c.l.b16 %v139
  %v1140 = vunpack.c.l.b16 %v140
  %v1141 = vunpack.c.l.b16 %v141
  %v1142 = vunpack.c.l.b16 %v142
  %v1143 = vunpack.c.l.b16 %v143
  %v1144 = vunpack.c.l.b16 %v144
  %v1145 = vunpack.c.l.b16 %v145
  %v1146 = vunpack.c.l.b16 %v146
  %v1147 = vunpack.c.l.b16 %v147
  %v1148 = vunpack.c.l.b16 %v148
  %v1149 = vunpack.c.l.b16 %v149
  %v1150 = vunpack.c.l.b16 %v150
  %v1151 = vunpack.c.l.b16 %v151
  %v1152 = vunpack.c.l.b16 %v152
  %v1153 = vunpack.c.l.b16 %v153
  %v1154 = vunpack.c.l.b16 %v154
  %v1155 = vunpack.c.l.b16 %v155
  %v1156 = vunpack.c.l.b16 %v156
  %v1157 = vunpack.c.l.b16 %v157
  %v1158 = vunpack.c.l.b16 %v158
  %v1159 = vunpack.c.l.b16 %v159
  %v1160 = vunpack.c.l.b16 %v160
  %v1161 = vunpack.c.l.b16 %v161
  %v1162 = vunpack.c.l.b16 %v162
  %v1163 = vunpack.c.l.b16 %v163
  %v1164 = vunpack.c.l.b16 %v164
  %v1165 = vunpack.c.l.b16 %v165
  %v1166 = vunpack.c.l.b16 %v166
  %v1167 = vunpack.c.l.b16 %v167
  %v1168 = vunpack.c.l.b16 %v168
  %v1169 = vunpack.c.l.b16 %v169
  %v1170 = vunpack.c.l.b16 %v170
  %v1171 = vunpack.c.l.b16 %v171
  %v1172 = vunpack.c.l.b16 %v172
  %v1173 = vunpack.c.l.b16 %v173
  %v1174 = vunpack.c.l.b16 %v174
  %v1175 = vunpack.c.l.b16 %v175
  %v1176 = vunpack.c.l.b16 %v176
  %v1177 = vunpack.c.l.b16 %v177
  %v1178 = vunpack.c.l.b16 %v178
  %v1179 = vunpack.c.l.b16 %v179
  %v1180 = vunpack.c.l.b16 %v180
  %v1181 = vunpack.c.l.b16 %v181
  %v1182 = vunpack.c.l.b16 %v182
  %v1183 = vunpack.c.l.b16 %v183
  %v1184 = vunpack.c.l.b16 %v184
  %v1185 = vunpack.c.l.b16 %v185
  %v1186 = vunpack.c.l.b16 %v186
  %v1187 = vunpack.c.l.b16 %v187
  %v1188 = vunpack.c.l.b16 %v188
  %v1189 = vunpack.c.l.b16 %v189
  %v1190 = vunpack.c.l.b16 %v190
  %v1191 = vunpack.c.l.b16 %v191
  %v1192 = vunpack.c.l.b16 %v192
  %v1193 = vunpack.c.l.b16 %v193
  %v1194 = vunpack.c.l.b16 %v194
  %v1195 = vunpack.c.l.b16 %v195
  %v1196 = vunpack.c.l.b16 %v196
  %v1197 = vunpack.c.l.b16 %v197
  %v1198 = vunpack.c.l.b16 %v198
  %v1199 = vunpack.c.l.b16 %v199
  %v1200 = vunpack.c.l.b16 %v200
  %v1201 = vunpack.c.l.b16 %v201
  %v1202 = vunpack.c.l.b16 %v202
  %v1203 = vunpack.c.l.b16 %v203
  %v1204 = vunpack.c.l.b16 %v204
  %v1205 = vunpack.c.l.b16 %v205
  %v1206 = vunpack.c.l.b16 %v206
  %v1207 = vunpack.c.l.b16 %v207
  %v1208 = vunpack.c.l.b16 %v208
  %v1209 = vunpack.c.l.b16 %v209
  %v1210 = vunpack.c.l.b16 %v210
  %v1211 = vunpack.c.l.b16 %v211
  %v1212 = vunpack.c.l.b16 %v212
  %v1213 = vunpack.c.l.b16 %v213
  %v1214 = vunpack.c.l.b16 %v214
  %v1215 = vunpack.c.l.b16 %v215
  %v1216 = vunpack.c.l.b16 %v216
  %v1217 = vunpack.c.l.b16 %v217
  %v1218 = vunpack.c.l.b16 %v218
  %v1219 = vunpack.c.l.b16 %v219
  %v1220 = vunpack.c.l.b16 %v220
  %v1221 = vunpack.c.l.b16 %v221
  %v1222 = vunpack.c.l.b16 %v222
  %v1223 = vunpack.c.l.b16 %v223
  %v1224 = vunpack.c.l.b16 %v224
  %v1225 = vunpack.c.l.b16 %v225
  %v1226 = vunpack.c.l.b16 %v226
  %v1227 = vunpack.c.l.b16 %v227
  %v1228 = vunpack.c.l.b16 %v228
  %v1229 = vunpack.c.l.b16 %v229
  %v1230 = vunpack.c.l.b16 %v230
  %v1231 = vunpack.c.l.b16 %v231
  %v1232 = vunpack.c.l.b16 %v232
  %v1233 = vunpack.c.l.b16 %v233
  %v1234 = vunpack.c.l.b16 %v234
  %v1235 = vunpack.c.l.b16 %v235
  %v1236 = vunpack.c.l.b16 %v236
  %v1237 = vunpack.c.l.b16 %v237
  %v1238 = vunpack.c.l.b16 %v238
  %v1239 = vunpack.c.l.b16 %v239
  %v1240 = vunpack.c.l.b16 %v240
  %v1241 = vunpack.c.l.b16 %v241
  %v1242 = vunpack.c.l.b16 %v242
  %v1243 = vunpack.c.l.b16 %v243
  %v1244 = vunpack.c.l.b16 %v244
  %v1245 = vunpack.c.l.b16 %v245
  %v1246 = vunpack.c.l.b16 %v246
  %v1247 = vunpack.c.l.b16 %v247
  %v1248 = vunpack.c.l.b16 %v248
  %v1249 = vunpack.c.l.b16 %v249
  %v1250 = vunpack.c.l.b16 %v250
  %v1251 = vunpack.c.l.b16 %v251
  %v1252 = vunpack.c.l.b16 %v252
  %v1253 = vunpack.c.l.b16 %v253
  %v1254 = vunpack.c.l.b16 %v254
  %v1255 = vunpack.c.l.b16 %v255
  %v1256 = vunpack.c.l.b16 %v256
  %v1257 = vunpack.c.l.b16 %v257
  %v1258 = vunpack.c.l.b16 %v258
  %v1259 = vunpack.c.l.b16 %v259
  %v1260 = vunpack.c.l.b16 %v260
  %v1261 = vunpack.c.l.b16 %v261
  %v1262 = vunpack.c.l.b16 %v262
  %v1263 = vunpack.c.l.b16 %v263
  %v1264 = vunpack.c.l.b16 %v264
  %v1265 = vunpack.c.l.b16 %v265
  %v1266 = vunpack.c.l.b16 %v266
  %v1267 = vunpack.c.l.b16 %v267
  %v1268 = vunpack.c.l.b16 %v268
  %v1269 = vunpack.c.l.b16 %v269
  %v1270 = vunpack.c.l.b16 %v270
  %v1271 = vunpack.c.l.b16 %v271
  %v1272 = vunpack.c.l.b16 %v272
  %v1273 = vunpack.c.l.b16 %v273
  %v1274 = vunpack.c.l.b16 %v274
  %v1275 = vunpack.c.l.b16 %v275
  %v1276 = vunpack.c.l.b16 %v276
  %v1277 = vunpack.c.l.b16 %v277
  %v1278 = vunpack.c.l.b16 %v278
  %v1279 = vunpack.c.l.b16 %v279
  %v1280 = vunpack.c.l.b16 %v280
  %v1281 = vunpack.c.l.b16 %v281
  %v1282 = vunpack.c.l.b16 %v282
  %v1283 = vunpack.c.l.b16 %v283
  %v1284 = vunpack.c.l.b16 %v284
  %v1285 = vunpack.c.l.b16 %v285
  %v1286 = vunpack.c.l.b16 %v286
  %v1287 = vunpack.c.l.b16 %v287
  %v1288 = vunpack.c.l.b16 %v288
  %v1289 = vunpack.c.l.b16 %v289
  %v1290 = vunpack.c.l.b16 %v290
  %v1291 = vunpack.c.l.b16 %v291
  %v1292 = vunpack.c.l.b16 %v292
  %v1293 = vunpack.c.l.b16 %v293
  %v1294 = vunpack.c.l.b16 %v294
  %v1295 = vunpack.c.l.b16 %v295
  %v1296 = vunpack.c.l.b16 %v296
  %v1297 = vunpack.c.l.b16 %v297
  %v1298 = vunpack.c.l.b16 %v298
  %v1299 = vunpack.c.l.b16 %v299
  %v1300 = vunpack.c.l.b16 %v300
  %v1301 = vunpack.c.l.b16 %v301
  %v1302 = vunpack.c.l.b16 %v302
  %v1303 = vunpack.c.l.b16 %v303
  %v1304 = vunpack.c.l.b16 %v304
  %v1305 = vunpack.c.l.b16 %v305
  %v1306 = vunpack.c.l.b16 %v306
  %v1307 = vunpack.c.l.b16 %v307
  %v1308 = vunpack.c.l.b16 %v308
  %v1309 = vunpack.c.l.b16 %v309
  %v1310 = vunpack.c.l.b16 %v310
  %v1311 = vunpack.c.l.b16 %v311
  %v1312 = vunpack.c.l.b16 %v312
  %v1313 = vunpack.c.l.b16 %v313
  %v1314 = vunpack.c.l.b16 %v314
  %v1315 = vunpack.c.l.b16 %v315
  %v1316 = vunpack.c.l.b16 %v316
  %v1317 = vunpack.c.l.b16 %v317
  %v1318 = vunpack.c.l.b16 %v318
  %v1319 = vunpack.c.l.b16 %v319
  %v1320 = vunpack.c.l.b16 %v320
  %v1321 = vunpack.c.l.b16 %v321
  %v1322 = vunpack.c.l.b16 %v322
  %v1323 = vunpack.c.l.b16 %v323
  %v1324 = vunpack.c.l.b16 %v324
  %v1325 = vunpack.c.l.b16 %v325
  %v1326 = vunpack.c.l.b16 %v326
  %v1327 = vunpack.c.l.b16 %v327
  %v1328 = vunpack.c.l.b16 %v328
  %v1329 = vunpack.c.l.b16 %v329
  %v1330 = vunpack.c.l.b16 %v330
  %v1331 = vunpack.c.l.b16 %v331
  %v1332 = vunpack.c.l.b16 %v332
  %v1333 = vunpack.c.l.b16 %v333
  %v1334 = vunpack.c.l.b16 %v334
  %v1335 = vunpack.c.l.b16 %v335
  %v1336 = vunpack.c.l.b16 %v336
  %v1337 = vunpack.c.l.b16 %v337
  %v1338 = vunpack.c.l.b16 %v338
  %v1339 = vunpack.c.l.b16 %v339
  %v1340 = vunpack.c.l.b16 %v340
  %v1341 = vunpack.c.l.b16 %v341
  %v1342 = vunpack.c.l.b16 %v342
  %v1343 = vunpack.c.l.b16 %v343
  %v1344 = vunpack.c.l.b16 %v344
  %v1345 = vunpack.c.l.b16 %v345
  %v1346 = vunpack.c.l.b16 %v346
  %v1347 = vunpack.c.l.b16 %v347
  %v1348 = vunpack.c.l.b16 %v348
  %v1349 = vunpack.c.l.b16 %v349
  %v1350 = vunpack.c.l.b16 %v350
  %v1351 = vunpack.c.l.b16 %v351
  %v1352 = vunpack.c.l.b16 %v352
  %v1353 = vunpack.c.l.b16 %v353
  %v1354 = vunpack.c.l.b16 %v354
  %v1355 = vunpack.c.l.b16 %v355
  %v1356 = vunpack.c.l.b16 %v356
  %v1357 = vunpack.c.l.b16 %v357
  %v1358 = vunpack.c.l.b16 %v358
  %v1359 = vunpack.c.l.b16 %v359
  %v1360 = vunpack.c.l.b16 %v360
  %v1361 = vunpack.c.l.b16 %v361
  %v1362 = vunpack.c.l.b16 %v362
  %v1363 = vunpack.c.l.b16 %v363
  %v1364 = vunpack.c.l.b16 %v364
  %v1365 = vunpack.c.l.b16 %v365
  %v1366 = vunpack.c.l.b16 %v366
  %v1367 = vunpack.c.l.b16 %v367
  %v1368 = vunpack.c.l.b16 %v368
  %v1369 = vunpack.c.l.b16 %v369
  %v1370 = vunpack.c.l.b16 %v370
  %v1371 = vunpack.c.l.b16 %v371
  %v1372 = vunpack.c.l.b16 %v372
  %v1373 = vunpack.c.l.b16 %v373
  %v1374 = vunpack.c.l.b16 %v374
  %v1375 = vunpack.c.l.b16 %v375
  %v1376 = vunpack.c.l.b16 %v376
  %v1377 = vunpack.c.l.b16 %v377
  %v1378 = vunpack.c.l.b16 %v378
  %v1379 = vunpack.c.l.b16 %v379
  %v1380 = vunpack.c.l.b16 %v380
  %v1381 = vunpack.c.l.b16 %v381
  %v1382 = vunpack.c.l.b16 %v382
  %v1383 = vunpack.c.l.b16 %v383
  %v1384 = vunpack.c.l.b16 %v384
  %v1385 = vunpack.c.l.b16 %v385
  %v1386 = vunpack.c.l.b16 %v386
  %v1387 = vunpack.c.l.b16 %v387
  %v1388 = vunpack.c.l.b16 %v388
  %v1389 = vunpack.c.l.b16 %v389
  %v1390 = vunpack.c.l.b16 %v390
  %v1391 = vunpack.c.l.b16 %v391
  %v1392 = vunpack.c.l.b16 %v392
  %v1393 = vunpack.c.l.b16 %v393
  %v1394 = vunpack.c.l.b16 %v394
  %v1395 = vunpack.c.l.b16 %v395
  %v1396 = vunpack.c.l.b16 %v396
  %v1397 = vunpack.c.l.b16 %v397
  %v1398 = vunpack.c.l.b16 %v398
  %v1399 = vunpack.c.l.b16 %v399
  %v1400 = vunpack.c.l.b16 %v400
  %v1401 = vunpack.c.l.b16 %v401
  %v1402 = vunpack.c.l.b16 %v402
  %v1403 = vunpack.c.l.b16 %v403
  %v1404 = vunpack.c.l.b16 %v404
  %v1405 = vunpack.c.l.b16 %v405
  %v1406 = vunpack.c.l.b16 %v406
  %v1407 = vunpack.c.l.b16 %v407
  %v1408 = vunpack.c.l.b16 %v408
  %v1409 = vunpack.c.l.b16 %v409
  %v1410 = vunpack.c.l.b16 %v410
  %v1411 = vunpack.c.l.b16 %v411
  %v1412 = vunpack.c.l.b16 %v412
  %v1413 = vunpack.c.l.b16 %v413
  %v1414 = vunpack.c.l.b16 %v414
  %v1415 = vunpack.c.l.b16 %v415
  %v1416 = vunpack.c.l.b16 %v416
  %v1417 = vunpack.c.l.b16 %v417
  %v1418 = vunpack.c.l.b16 %v418
  %v1419 = vunpack.c.l.b16 %v419
  %v1420 = vunpack.c.l.b16 %v420
  %v1421 = vunpack.c.l.b16 %v421
  %v1422 = vunpack.c.l.b16 %v422
  %v1423 = vunpack.c.l.b16 %v423
  %v1424 = vunpack.c.l.b16 %v424
  %v1425 = vunpack.c.l.b16 %v425
  %v1426 = vunpack.c.l.b16 %v426
  %v1427 = vunpack.c.l.b16 %v427
  %v1428 = vunpack.c.l.b16 %v428
  %v1429 = vunpack.c.l.b16 %v429
  %v1430 = vunpack.c.l.b16 %v430
  %v1431 = vunpack.c.l.b16 %v431
  %v1432 = vunpack.c.l.b16 %v432
  %v1433 = vunpack.c.l.b16 %v433
  %v1434 = vunpack.c.l.b16 %v434
  %v1435 = vunpack.c.l.b16 %v435
  %v1436 = vunpack.c.l.b16 %v436
  %v1437 = vunpack.c.l.b16 %v437
  %v1438 = vunpack.c.l.b16 %v438
  %v1439 = vunpack.c.l.b16 %v439
  %v1440 = vunpack.c.l.b16 %v440
  %v1441 = vunpack.c.l.b16 %v441
  %v1442 = vunpack.c.l.b16 %v442
  %v1443 = vunpack.c.l.b16 %v443
  %v1444 = vunpack.c.l.b16 %v444
  %v1445 = vunpack.c.l.b16 %v445
  %v1446 = vunpack.c.l.b16 %v446
  %v1447 = vunpack.c.l.b16 %v447
  %v1448 = vunpack.c.l.b16 %v448
  %v1449 = vunpack.c.l.b16 %v449
  %v1450 = vunpack.c.l.b16 %v450
  %v1451 = vunpack.c.l.b16 %v451
  %v1452 = vunpack.c.l.b16 %v452
  %v1453 = vunpack.c.l.b16 %v453
  %v1454 = vunpack.c.l.b16 %v454
  %v1455 = vunpack.c.l.b16 %v455
  %v1456 = vunpack.c.l.b16 %v456
  %v1457 = vunpack.c.l.b16 %v457
  %v1458 = vunpack.c.l.b16 %v458
  %v1459 = vunpack.c.l.b16 %v459
  %v1460 = vunpack.c.l.b16 %v460
  %v1461 = vunpack.c.l.b16 %v461
  %v1462 = vunpack.c.l.b16 %v462
  %v1463 = vunpack.c.l.b16 %v463
  %v1464 = vunpack.c.l.b16 %v464
  %v1465 = vunpack.c.l.b16 %v465
  %v1466 = vunpack.c.l.b16 %v466
  %v1467 = vunpack.c.l.b16 %v467
  %v1468 = vunpack.c.l.b16 %v468
  %v1469 = vunpack.c.l.b16 %v469
  %v1470 = vunpack.c.l.b16 %v470
  %v1471 = vunpack.c.l.b16 %v471
  %v1472 = vpack.c.b16 %v1041, %v1040
  %v1473 = vpack.c.b16 %v1043, %v1042
  %v1474 = vpack.c.b16 %v1045, %v1044
  %v1475 = vpack.c.b16 %v1047, %v1046
  %v1476 = vpack.c.b16 %v1049, %v1048
  %v1477 = vpack.c.b16 %v1051, %v1050
  %v1478 = vpack.c.b16 %v1053, %v1052
  %v1479 = vpack.c.b16 %v1055, %v1054
  %v1480 = vpack.c.b16 %v1057, %v1056
  %v1481 = vpack.c.b16 %v1059, %v1058
  %v1482 = vpack.c.b16 %v1061, %v1060
  %v1483 = vpack.c.b16 %v1063, %v1062
  %v1484 = vpack.c.b16 %v1065, %v1064
  %v1485 = vpack.c.b16 %v1067, %v1066
  %v1486 = vpack.c.b16 %v1069, %v1068
  %v1487 = vpack.c.b16 %v1071, %v1070
  %v1488 = vpack.c.b16 %v1073, %v1072
  %v1489 = vpack.c.b16 %v1075, %v1074
  %v1490 = vpack.c.b16 %v1077, %v1076
  %v1491 = vpack.c.b16 %v1079, %v1078
  %v1492 = vpack.c.b16 %v1081, %v1080
  %v1493 = vpack.c.b16 %v1083, %v1082
  %v1494 = vpack.c.b16 %v1085, %v1084
  %v1495 = vpack.c.b16 %v1087, %v1086
  %v1496 = vpack.c.b16 %v1089, %v1088
  %v1497 = vpack.c.b16 %v1091, %v1090
  %v1498 = vpack.c.b16 %v1093, %v1092
  %v1499 = vpack.c.b16 %v1095, %v1094
  %v1500 = vpack.c.b16 %v1097, %v1096
  %v1501 = vpack.c.b16 %v1099, %v1098
  %v1502 = vpack.c.b16 %v1101, %v1100
  %v1503 = vpack.c.b16 %v1103, %v1102
  %v1504 = vpack.c.b16 %v1105, %v1104
  %v1505 = vpack.c.b16 %v1107, %v1106
  %v1506 = vpack.c.b16 %v1109, %v1108
  %v1507 = vpack.c.b16 %v1111, %v1110
  %v1508 = vpack.c.b16 %v1113, %v1112
  %v1509 = vpack.c.b16 %v1115, %v1114
  %v1510 = vpack.c.b16 %v1117, %v1116
  %v1511 = vpack.c.b16 %v1119, %v1118
  %v1512 = vpack.c.b16 %v1121, %v1120
  %v1513 = vpack.c.b16 %v1123, %v1122
  %v1514 = vpack.c.b16 %v1125, %v1124
  %v1515 = vpack.c.b16 %v1127, %v1126
  %v1516 = vpack.c.b16 %v1129, %v1128
  %v1517 = vpack.c.b16 %v1131, %v1130
  %v1518 = vpack.c.b16 %v1133, %v1132
  %v1519 = vpack.c.b16 %v1135, %v1134
  %v1520 = vpack.c.b16 %v1137, %v1136
  %v1521 = vpack.c.b16 %v1139, %v1138
  %v1522 = vpack.c.b16 %v1141, %v1140
  %v1523 = vpack.c.b16 %v1143, %v1142
  %v1524 = vpack.c.b16 %v1145, %v1144
  %v1525 = vpack.c.b16 %v1147, %v1146
  %v1526 = vpack.c.b16 %v1149, %v1148
  %v1527 = vpack.c.b16 %v1151, %v1150
  %v1528 = vpack.c.b16 %v1153, %v1152
  %v1529 = vpack.c.b16 %v1155, %v1154
  %v1530 = vpack.c.b16 %v1157, %v1156
  %v1531 = vpack.c.b16 %v1159, %v1158
  %v1532 = vpack.c.b16 %v1161, %v1160
  %v1533 = vpack.c.b16 %v1163, %v1162
  %v1534 = vpack.c.b16 %v1165, %v1164
  %v1535 = vpack.c.b16 %v1167, %v1166
  %v1536 = vpack.c.b16 %v1169, %v1168
  %v1537 = vpack.c.b16 %v1171, %v1170
  %v1538 = vpack.c.b16 %v1173, %v1172
  %v1539 = vpack.c.b16 %v1175, %v1174
  %v1540 = vpack.c.b16 %v1177, %v1176
  %v1541 = vpack.c.b16 %v1179, %v1178
  %v1542 = vpack.c.b16 %v1181, %v1180
  %v1543 = vpack.c.b16 %v1183, %v1182
  %v1544 = vpack.c.b16 %v1185, %v1184
  %v1545 = vpack.c.b16 %v1187, %v1186
  %v1546 = vpack.c.b16 %v1189, %v1188
  %v1547 = vpack.c.b16 %v1191, %v1190
  %v1548 = vpack.c.b16 %v1193, %v1192
  %v1549 = vpack.c.b16 %v1195, %v1194
  %v1550 = vpack.c.b16 %v1197, %v1196
  %v1551 = vpack.c.b16 %v1199, %v1198
  %v1552 = vpack.c.b16 %v1201, %v1200
  %v1553 = vpack.c.b16 %v1203, %v1202
  %v1554 = vpack.c.b16 %v1205, %v1204
  %v1555 = vpack.c.b16 %v1207, %v1206
  %v1556 = vpack.c.b16 %v1209, %v1208
  %v1557 = vpack.c.b16 %v1211, %v1210
  %v1558 = vpack.c.b16 %v1213, %v1212
  %v1559 = vpack.c.b16 %v1215, %v1214
  %v1560 = vpack.c.b16 %v1217, %v1216
  %v1561 = vpack.c.b16 %v1219, %v1218
  %v1562 = vpack.c.b16 %v1221, %v1220
  %v1563 = vpack.c.b16 %v1223, %v1222
  %v1564 = vpack.c.b16 %v1225, %v1224
  %v1565 = vpack.c.b16 %v1227, %v1226
  %v1566 = vpack.c.b16 %v1229, %v1228
  %v1567 = vpack.c.b16 %v1231, %v1230
  %v1568 = vpack.c.b16 %v1233, %v1232
  %v1569 = vpack.c.b16 %v1235, %v1234
  %v1570 = vpack.c.b16 %v1237, %v1236
  %v1571 = vpack.c.b16 %v1239, %v1238
  %v1572 = vpack.c.b16 %v1241, %v1240
  %v1573 = vpack.c.b16 %v1243, %v1242
  %v1574 = vpack.c.b16 %v1245, %v1244
  %v1575 = vpack.c.b16 %v1247, %v1246
  %v1576 = vpack.c.b16 %v1249, %v1248
  %v1577 = vpack.c.b16 %v1251, %v1250
  %v1578 = vpack.c.b16 %v1253, %v1252
  %v1579 = vpack.c.b16 %v1255, %v1254
  %v1580 = vpack.c.b16 %v1257, %v1256
  %v1581 = vpack.c.b16 %v1259, %v1258
  %v1582 = vpack.c.b16 %v1261, %v1260
  %v1583 = vpack.c.b16 %v1263, %v1262
  %v1584 = vpack.c.b16 %v1265, %v1264
  %v1585 = vpack.c.b16 %v1267, %v1266
  %v1586 = vpack.c.b16 %v1269, %v1268
  %v1587 = vpack.c.b16 %v1271, %v1270
  %v1588 = vpack.c.b16 %v1273, %v1272
  %v1589 = vpack.c.b16 %v1275, %v1274
  %v1590 = vpack.c.b16 %v1277, %v1276
  %v1591 = vpack.c.b16 %v1279, %v1278
  %v1592 = vpack.c.b16 %v1281, %v1280
  %v1593 = vpack.c.b16 %v1283, %v1282
  %v1594 = vpack.c.b16 %v1285, %v1284
  %v1595 = vpack.c.b16 %v1287, %v1286
  %v1596 = vpack.c.b16 %v1289, %v1288
  %v1597 = vpack.c.b16 %v1291, %v1290
  %v1598 = vpack.c.b16 %v1293, %v1292
  %v1599 = vpack.c.b16 %v1295, %v1294
  %v1600 = vpack.c.b16 %v1297, %v1296
  %v1601 = vpack.c.b16 %v1299, %v1298
  %v1602 = vpack.c.b16 %v1301, %v1300
  %v1603 = vpack.c.b16 %v1303, %v1302
  %v1604 = vpack.c.b16 %v1305, %v1304
  %v1605 = vpack.c.b16 %v1307, %v1306
  %v1606 = vpack.c.b16 %v1309, %v1308
  %v1607 = vpack.c.b16 %v1311, %v1310
  %v1608 = vpack.c.b16 %v1313, %v1312
  %v1609 = vpack.c.b16 %v1315, %v1314
  %v1610 = vpack.c.b16 %v1317, %v1316
  %v1611 = vpack.c.b16 %v1319, %v1318
  %v1612 = vpack.c.b16 %v1321, %v1320
  %v1613 = vpack.c.b16 %v1323, %v1322
  %v1614 = vpack.c.b16 %v1325, %v1324
  %v1615 = vpack.c.b16 %v1327, %v1326
  %v1616 = vpack.c.b16 %v1329, %v1328
  %v1617 = vpack.c.b16 %v1331, %v1330
  %v1618 = vpack.c.b16 %v1333, %v1332
  %v1619 = vpack.c.b16 %v1335, %v1334
  %v1620 = vpack.c.b16 %v1337, %v1336
  %v1621 = vpack.c.b16 %v1339, %v1338
  %v1622 = vpack.c.b16 %v1341, %v1340
  %v1623 = vpack.c.b16 %v1343, %v1342
  %v1624 = vpack.c.b16 %v1345, %v1344
  %v1625 = vpack.c.b16 %v1347, %v1346
  %v1626 = vpack.c.b16 %v1349, %v1348
  %v1627 = vpack.c.b16 %v1351, %v1350
  %v1628 = vpack.c.b16 %v1353, %v1352
  %v1629 = vpack.c.b16 %v1355, %v1354
  %v1630 = vpack.c.b16 %v1357, %v1356
  %v1631 = vpack.c.b16 %v1359, %v1358
  %v1632 = vpack.c.b16 %v1361, %v1360
  %v1633 = vpack.c.b16 %v1363, %v1362
  %v1634 = vpack.c.b16 %v1365, %v1364
  %v1635 = vpack.c.b16 %v1367, %v1366
  %v1636 = vpack.c.b16 %v1369, %v1368
  %v1637 = vpack.c.b16 %v1371, %v1370
  %v1638 = vpack.c.b16 %v1373, %v1372
  %v1639 = vpack.c.b16 %v1375, %v1374
  %v1640 = vpack.c.b16 %v1377, %v1376
  %v1641 = vpack.c.b16 %v1379, %v1378
  %v1642 = vpack.c.b16 %v1381, %v1380
  %v1643 = vpack.c.b16 %v1383, %v1382
  %v1644 = vpack.c.b16 %v1385, %v1384
  %v1645 = vpack.c.b16 %v1387, %v1386
  %v1646 = vpack.c.b16 %v1389, %v1388
  %v1647 = vpack.c.b16 %v1391, %v1390
  %v1648 = vpack.c.b16 %v1393, %v1392
  %v1649 = vpack.c.b16 %v1395, %v1394
  %v1650 = vpack.c.b16 %v1397, %v1396
  %v1651 = vpack.c.b16 %v1399, %v1398
  %v1652 = vpack.c.b16 %v1401, %v1400
  %v1653 = vpack.c.b16 %v1403, %v1402
  %v1654 = vpack.c.b16 %v1405, %v1404
  %v1655 = vpack.c.b16 %v1407, %v1406
  %v1656 = vpack.c.b16 %v1409, %v1408
  %v1657 = vpack.c.b16 %v1411, %v1410
  %v1658 = vpack.c.b16 %v1413, %v1412
  %v1659 = vpack.c.b16 %v1415, %v1414
  %v1660 = vpack.c.b16 %v1417, %v1416
  %v1661 = vpack.c.b16 %v1419, %v1418
  %v1662 = vpack.c.b16 %v1421, %v1420
  %v1663 = vpack.c.b16 %v1423, %v1422
  %v1664 = vpack.c.b16 %v1425, %v1424
  %v1665 = vpack.c.b16 %v1427, %v1426
  %v1666 = vpack.c.b16 %v1429, %v1428
  %v1667 = vpack.c.b16 %v1431, %v1430
  %v1668 = vpack.c.b16 %v1433, %v1432
  %v1669 = vpack.c.b16 %v1435, %v1434
  %v1670 = vpack.c.b16 %v1437, %v1436
  %v1671 = vpack.c.b16 %v1439, %v1438
  %v1672 = vpack.c.b16 %v1441, %v1440
  %v1673 = vpack.c.b16 %v1443, %v1442
  %v1674 = vpack.c.b16 %v1445, %v1444
  %v1675 = vpack.c.b16 %v1447, %v1446
  %v1676 = vpack.c.b16 %v1449, %v1448
  %v1677 = vpack.c.b16 %v1451, %v1450
  %v1678 = vpack.c.b16 %v1453, %v1452
  %v1679 = vpack.c.b16 %v1455, %v1454
  %v1680 = vpack.c.b16 %v1457, %v1456
  %v1681 = vpack.c.b16 %v1459, %v1458
  %v1682 = vpack.c.b16 %v1461, %v1460
  %v1683 = vpack.c.b16 %v1463, %v1462
  %v1684 = vpack.c.b16 %v1465, %v1464
  %v1685 = vpack.c.b16 %v1467, %v1466
  %v1686 = vpack.c.b16 %v1469, %v1468
  %v1687 = vpack.c.b16 %v1471, %v1470
  %1904 = vmatprep.subr.bf16.mxu0 0
  %1905 = vmatpush1.bf16.msra.mxu0 %v1472
  %1906 = vmatprep.subr.bf16.mxu0 0
  %1907 = vmatpush1.bf16.msra.mxu0 %v1473
  %1908 = vmatprep.subr.bf16.mxu0 0
  %1909 = vmatpush1.bf16.msra.mxu0 %v1474
  %1910 = vmatprep.subr.bf16.mxu0 0
  %1911 = vmatpush1.bf16.msra.mxu0 %v1475
  %1912 = vmatprep.subr.bf16.mxu0 0
  %1913 = vmatpush1.bf16.msra.mxu0 %v1476
  %1914 = vmatprep.subr.bf16.mxu0 0
  %1915 = vmatpush1.bf16.msra.mxu0 %v1477
  %1916 = vmatprep.subr.bf16.mxu0 0
  %1917 = vmatpush1.bf16.msra.mxu0 %v1478
  %1918 = vmatprep.subr.bf16.mxu0 0
  %1919 = vmatpush1.bf16.msra.mxu0 %v1479
  %1920 = vmatprep.subr.bf16.mxu0 0
  %1921 = vmatpush1.bf16.msra.mxu0 %v1480
  %1922 = vmatprep.subr.bf16.mxu0 0
  %1923 = vmatpush1.bf16.msra.mxu0 %v1481
  %1924 = vmatprep.subr.bf16.mxu0 0
  %1925 = vmatpush1.bf16.msra.mxu0 %v1482
  %1926 = vmatprep.subr.bf16.mxu0 0
  %1927 = vmatpush1.bf16.msra.mxu0 %v1483
  %1928 = vmatprep.subr.bf16.mxu0 0
  %1929 = vmatpush1.bf16.msra.mxu0 %v1484
  %1930 = vmatprep.subr.bf16.mxu0 0
  %1931 = vmatpush1.bf16.msra.mxu0 %v1485
  %1932 = vmatprep.subr.bf16.mxu0 0
  %1933 = vmatpush1.bf16.msra.mxu0 %v1486
  %1934 = vmatprep.subr.bf16.mxu0 0
  %1935 = vmatpush1.bf16.msra.mxu0 %v1487
  %1936 = vmatprep.mubr.bf16.mxu0 %v555
  %1937 = vmatmul.mubr.bf16.gmra.mrb[0].mxu0 %v554
  %v1938 = vpop.f32.mrb[0].mxu0
  %v1939 = vadd.f32 0.0, %v1938
  %v1940 = vpop.f32.mrb[0].mxu0
  %v1941 = vpop.f32.mrb[0].mxu0
  %v1942 = vadd.f32 0.0, %v1941
  %v1943 = vpop.f32.mrb[0].mxu0
  %1944 = vdwg.mxu0
  %1945 = vmatprep.subr.bf16.mxu0 0
  %1946 = vmatpush1.bf16.msra.mxu0 %v1488
  %1947 = vmatprep.subr.bf16.mxu0 0
  %1948 = vmatpush1.bf16.msra.mxu0 %v1489
  %1949 = vmatprep.subr.bf16.mxu0 0
  %1950 = vmatpush1.bf16.msra.mxu0 %v1490
  %1951 = vmatprep.subr.bf16.mxu0 0
  %1952 = vmatpush1.bf16.msra.mxu0 %v1491
  %1953 = vmatprep.subr.bf16.mxu0 0
  %1954 = vmatpush1.bf16.msra.mxu0 %v1492
  %1955 = vmatprep.subr.bf16.mxu0 0
  %1956 = vmatpush1.bf16.msra.mxu0 %v1493
  %1957 = vmatprep.subr.bf16.mxu0 0
  %1958 = vmatpush1.bf16.msra.mxu0 %v1494
  %1959 = vmatprep.subr.bf16.mxu0 0
  %1960 = vmatpush1.bf16.msra.mxu0 %v1495
  %1961 = vmatprep.subr.bf16.mxu0 0
  %1962 = vmatpush1.bf16.msra.mxu0 %v1496
  %1963 = vmatprep.subr.bf16.mxu0 0
  %1964 = vmatpush1.bf16.msra.mxu0 %v1497
  %1965 = vmatprep.subr.bf16.mxu0 0
  %1966 = vmatpush1.bf16.msra.mxu0 %v1498
  %1967 = vmatprep.subr.bf16.mxu0 0
  %1968 = vmatpush1.bf16.msra.mxu0 %v1499
  %1969 = vmatprep.subr.bf16.mxu0 0
  %1970 = vmatpush1.bf16.msra.mxu0 %v1500
  %1971 = vmatprep.subr.bf16.mxu0 0
  %1972 = vmatpush1.bf16.msra.mxu0 %v1501
  %1973 = vmatprep.subr.bf16.mxu0 0
  %1974 = vmatpush1.bf16.msra.mxu0 %v1502
  %1975 = vmatprep.subr.bf16.mxu0 0
  %1976 = vmatpush1.bf16.msra.mxu0 %v1503
  %1977 = vmatprep.mubr.bf16.mxu0 %v557
  %1978 = vmatmul.mubr.bf16.gmra.mrb[0].mxu0 %v556
  %v1979 = vpop.f32.mrb[0].mxu0
  %v1980 = vadd.f32 %v1939, %v1979
  %v1981 = vpop.f32.mrb[0].mxu0
  %v1982 = vpop.f32.mrb[0].mxu0
  %v1983 = vadd.f32 %v1942, %v1982
  %v1984 = vpop.f32.mrb[0].mxu0
  %1985 = vdwg.mxu0
  %1986 = vmatprep.subr.bf16.mxu0 0
  %1987 = vmatpush1.bf16.msra.mxu0 %v1504
  %1988 = vmatprep.subr.bf16.mxu0 0
  %1989 = vmatpush1.bf16.msra.mxu0 %v1505
  %1990 = vmatprep.subr.bf16.mxu0 0
  %1991 = vmatpush1.bf16.msra.mxu0 %v1506
  %1992 = vmatprep.subr.bf16.mxu0 0
  %1993 = vmatpush1.bf16.msra.mxu0 %v1507
  %1994 = vmatprep.subr.bf16.mxu0 0
  %1995 = vmatpush1.bf16.msra.mxu0 %v1508
  %1996 = vmatprep.subr.bf16.mxu0 0
  %1997 = vmatpush1.bf16.msra.mxu0 %v1509
  %1998 = vmatprep.subr.bf16.mxu0 0
  %1999 = vmatpush1.bf16.msra.mxu0 %v1510
  %2000 = vmatprep.subr.bf16.mxu0 0
  %2001 = vmatpush1.bf16.msra.mxu0 %v1511
  %2002 = vmatprep.subr.bf16.mxu0 0
  %2003 = vmatpush1.bf16.msra.mxu0 %v1512
  %2004 = vmatprep.subr.bf16.mxu0 0
  %2005 = vmatpush1.bf16.msra.mxu0 %v1513
  %2006 = vmatprep.subr.bf16.mxu0 0
  %2007 = vmatpush1.bf16.msra.mxu0 %v1514
  %2008 = vmatprep.subr.bf16.mxu0 0
  %2009 = vmatpush1.bf16.msra.mxu0 %v1515
  %2010 = vmatprep.subr.bf16.mxu0 0
  %2011 = vmatpush1.bf16.msra.mxu0 %v1516
  %2012 = vmatprep.subr.bf16.mxu0 0
  %2013 = vmatpush1.bf16.msra.mxu0 %v1517
  %2014 = vmatprep.subr.bf16.mxu0 0
  %2015 = vmatpush1.bf16.msra.mxu0 %v1518
  %2016 = vmatprep.subr.bf16.mxu0 0
  %2017 = vmatpush1.bf16.msra.mxu0 %v1519
  %2018 = vmatprep.mubr.bf16.mxu0 %v559
  %2019 = vmatmul.mubr.bf16.gmra.mrb[0].mxu0 %v558
  %v2020 = vpop.f32.mrb[0].mxu0
  %v2021 = vadd.f32 %v1980, %v2020
  %v2022 = vpop.f32.mrb[0].mxu0
  %v2023 = vpop.f32.mrb[0].mxu0
  %v2024 = vadd.f32 %v1983, %v2023
  %v2025 = vpop.f32.mrb[0].mxu0
  %2026 = vdwg.mxu0
  %2027 = vmatprep.subr.bf16.mxu0 0
  %2028 = vmatpush1.bf16.msra.mxu0 %v1520
  %2029 = vmatprep.subr.bf16.mxu0 0
  %2030 = vmatpush1.bf16.msra.mxu0 %v1521
  %2031 = vmatprep.subr.bf16.mxu0 0
  %2032 = vmatpush1.bf16.msra.mxu0 %v1522
  %2033 = vmatprep.subr.bf16.mxu0 0
  %2034 = vmatpush1.bf16.msra.mxu0 %v1523
  %2035 = vmatprep.subr.bf16.mxu0 0
  %2036 = vmatpush1.bf16.msra.mxu0 %v1524
  %2037 = vmatprep.subr.bf16.mxu0 0
  %2038 = vmatpush1.bf16.msra.mxu0 %v1525
  %2039 = vmatprep.subr.bf16.mxu0 0
  %2040 = vmatpush1.bf16.msra.mxu0 %v1526
  %2041 = vmatprep.subr.bf16.mxu0 0
  %2042 = vmatpush1.bf16.msra.mxu0 %v1527
  %2043 = vmatprep.subr.bf16.mxu0 0
  %2044 = vmatpush1.bf16.msra.mxu0 %v1528
  %2045 = vmatprep.subr.bf16.mxu0 0
  %2046 = vmatpush1.bf16.msra.mxu0 %v1529
  %2047 = vmatprep.subr.bf16.mxu0 0
  %2048 = vmatpush1.bf16.msra.mxu0 %v1530
  %2049 = vmatprep.subr.bf16.mxu0 0
  %2050 = vmatpush1.bf16.msra.mxu0 %v1531
  %2051 = vmatprep.subr.bf16.mxu0 0
  %2052 = vmatpush1.bf16.msra.mxu0 %v1532
  %2053 = vmatprep.subr.bf16.mxu0 0
  %2054 = vmatpush1.bf16.msra.mxu0 %v1533
  %2055 = vmatprep.subr.bf16.mxu0 0
  %2056 = vmatpush1.bf16.msra.mxu0 %v1534
  %2057 = vmatprep.subr.bf16.mxu0 0
  %2058 = vmatpush1.bf16.msra.mxu0 %v1535
  %2059 = vmatprep.mubr.bf16.mxu0 %v561
  %2060 = vmatmul.mubr.bf16.gmra.mrb[0].mxu0 %v560
  %v2061 = vpop.f32.mrb[0].mxu0
  %v2062 = vadd.f32 %v2021, %v2061
  %v2063 = vpop.f32.mrb[0].mxu0
  %v2064 = vpop.f32.mrb[0].mxu0
  %v2065 = vadd.f32 %v2024, %v2064
  %v2066 = vpop.f32.mrb[0].mxu0
  %2067 = vdwg.mxu0
  %2068 = vmatprep.subr.bf16.mxu0 0
  %2069 = vmatpush1.bf16.msra.mxu0 %v1536
  %2070 = vmatprep.subr.bf16.mxu0 0
  %2071 = vmatpush1.bf16.msra.mxu0 %v1537
  %2072 = vmatprep.subr.bf16.mxu0 0
  %2073 = vmatpush1.bf16.msra.mxu0 %v1538
  %2074 = vmatprep.subr.bf16.mxu0 0
  %2075 = vmatpush1.bf16.msra.mxu0 %v1539
  %2076 = vmatprep.subr.bf16.mxu0 0
  %2077 = vmatpush1.bf16.msra.mxu0 %v1540
  %2078 = vmatprep.subr.bf16.mxu0 0
  %2079 = vmatpush1.bf16.msra.mxu0 %v1541
  %2080 = vmatprep.subr.bf16.mxu0 0
  %2081 = vmatpush1.bf16.msra.mxu0 %v1542
  %2082 = vmatprep.subr.bf16.mxu0 0
  %2083 = vmatpush1.bf16.msra.mxu0 %v1543
  %2084 = vmatprep.subr.bf16.mxu0 0
  %2085 = vmatpush1.bf16.msra.mxu0 %v1544
  %2086 = vmatprep.subr.bf16.mxu0 0
  %2087 = vmatpush1.bf16.msra.mxu0 %v1545
  %2088 = vmatprep.subr.bf16.mxu0 0
  %2089 = vmatpush1.bf16.msra.mxu0 %v1546
  %2090 = vmatprep.subr.bf16.mxu0 0
  %2091 = vmatpush1.bf16.msra.mxu0 %v1547
  %2092 = vmatprep.subr.bf16.mxu0 0
  %2093 = vmatpush1.bf16.msra.mxu0 %v1548
  %2094 = vmatprep.subr.bf16.mxu0 0
  %2095 = vmatpush1.bf16.msra.mxu0 %v1549
  %2096 = vmatprep.subr.bf16.mxu0 0
  %2097 = vmatpush1.bf16.msra.mxu0 %v1550
  %2098 = vmatprep.subr.bf16.mxu0 0
  %2099 = vmatpush1.bf16.msra.mxu0 %v1551
  %2100 = vmatprep.mubr.bf16.mxu0 %v563
  %2101 = vmatmul.mubr.bf16.gmra.mrb[0].mxu0 %v562
  %v2102 = vpop.f32.mrb[0].mxu0
  %v2103 = vadd.f32 %v2062, %v2102
  %v2104 = vpop.f32.mrb[0].mxu0
  %v2105 = vpop.f32.mrb[0].mxu0
  %v2106 = vadd.f32 %v2065, %v2105
  %v2107 = vpop.f32.mrb[0].mxu0
  %2108 = vdwg.mxu0
  %2109 = vmatprep.subr.bf16.mxu0 0
  %2110 = vmatpush1.bf16.msra.mxu0 %v1552
  %2111 = vmatprep.subr.bf16.mxu0 0
  %2112 = vmatpush1.bf16.msra.mxu0 %v1553
  %2113 = vmatprep.subr.bf16.mxu0 0
  %2114 = vmatpush1.bf16.msra.mxu0 %v1554
  %2115 = vmatprep.subr.bf16.mxu0 0
  %2116 = vmatpush1.bf16.msra.mxu0 %v1555
  %2117 = vmatprep.subr.bf16.mxu0 0
  %2118 = vmatpush1.bf16.msra.mxu0 %v1556
  %2119 = vmatprep.subr.bf16.mxu0 0
  %2120 = vmatpush1.bf16.msra.mxu0 %v1557
  %2121 = vmatprep.subr.bf16.mxu0 0
  %2122 = vmatpush1.bf16.msra.mxu0 %v1558
  %2123 = vmatprep.subr.bf16.mxu0 0
  %2124 = vmatpush1.bf16.msra.mxu0 %v1559
  %2125 = vmatprep.subr.bf16.mxu0 0
  %2126 = vmatpush1.bf16.msra.mxu0 %v1560
  %2127 = vmatprep.subr.bf16.mxu0 0
  %2128 = vmatpush1.bf16.msra.mxu0 %v1561
  %2129 = vmatprep.subr.bf16.mxu0 0
  %2130 = vmatpush1.bf16.msra.mxu0 %v1562
  %2131 = vmatprep.subr.bf16.mxu0 0
  %2132 = vmatpush1.bf16.msra.mxu0 %v1563
  %2133 = vmatprep.subr.bf16.mxu0 0
  %2134 = vmatpush1.bf16.msra.mxu0 %v1564
  %2135 = vmatprep.subr.bf16.mxu0 0
  %2136 = vmatpush1.bf16.msra.mxu0 %v1565
  %2137 = vmatprep.subr.bf16.mxu0 0
  %2138 = vmatpush1.bf16.msra.mxu0 %v1566
  %2139 = vmatprep.subr.bf16.mxu0 0
  %2140 = vmatpush1.bf16.msra.mxu0 %v1567
  %2141 = vmatprep.mubr.bf16.mxu0 %v565
  %2142 = vmatmul.mubr.bf16.gmra.mrb[0].mxu0 %v564
  %v2143 = vpop.f32.mrb[0].mxu0
  %v2144 = vadd.f32 %v2103, %v2143
  %v2145 = vpop.f32.mrb[0].mxu0
  %v2146 = vpop.f32.mrb[0].mxu0
  %v2147 = vadd.f32 %v2106, %v2146
  %v2148 = vpop.f32.mrb[0].mxu0
  %2149 = vdwg.mxu0
  %2150 = vmatprep.subr.bf16.mxu0 0
  %2151 = vmatpush1.bf16.msra.mxu0 %v1568
  %2152 = vmatprep.subr.bf16.mxu0 0
  %2153 = vmatpush1.bf16.msra.mxu0 %v1569
  %2154 = vmatprep.subr.bf16.mxu0 0
  %2155 = vmatpush1.bf16.msra.mxu0 %v1570
  %2156 = vmatprep.subr.bf16.mxu0 0
  %2157 = vmatpush1.bf16.msra.mxu0 %v1571
  %2158 = vmatprep.subr.bf16.mxu0 0
  %2159 = vmatpush1.bf16.msra.mxu0 %v1572
  %2160 = vmatprep.subr.bf16.mxu0 0
  %2161 = vmatpush1.bf16.msra.mxu0 %v1573
  %2162 = vmatprep.subr.bf16.mxu0 0
  %2163 = vmatpush1.bf16.msra.mxu0 %v1574
  %2164 = vmatprep.subr.bf16.mxu0 0
  %2165 = vmatpush1.bf16.msra.mxu0 %v1575
  %2166 = vmatprep.subr.bf16.mxu0 0
  %2167 = vmatpush1.bf16.msra.mxu0 %v1576
  %2168 = vmatprep.subr.bf16.mxu0 0
  %2169 = vmatpush1.bf16.msra.mxu0 %v1577
  %2170 = vmatprep.subr.bf16.mxu0 0
  %2171 = vmatpush1.bf16.msra.mxu0 %v1578
  %2172 = vmatprep.subr.bf16.mxu0 0
  %2173 = vmatpush1.bf16.msra.mxu0 %v1579
  %2174 = vmatprep.subr.bf16.mxu0 0
  %2175 = vmatpush1.bf16.msra.mxu0 %v1580
  %2176 = vmatprep.subr.bf16.mxu0 0
  %2177 = vmatpush1.bf16.msra.mxu0 %v1581
  %2178 = vmatprep.subr.bf16.mxu0 0
  %2179 = vmatpush1.bf16.msra.mxu0 %v1582
  %2180 = vmatprep.subr.bf16.mxu0 0
  %2181 = vmatpush1.bf16.msra.mxu0 %v1583
  %2182 = vmatprep.mubr.bf16.mxu0 %v567
  %2183 = vmatmul.mubr.bf16.gmra.mrb[0].mxu0 %v566
  %v2184 = vpop.f32.mrb[0].mxu0
  %v2185 = vadd.f32 %v2144, %v2184
  %v2186 = vpop.f32.mrb[0].mxu0
  %v2187 = vpop.f32.mrb[0].mxu0
  %v2188 = vadd.f32 %v2147, %v2187
  %v2189 = vpop.f32.mrb[0].mxu0
  %2190 = vdwg.mxu0
  %2191 = vmatprep.subr.bf16.mxu0 0
  %2192 = vmatpush1.bf16.msra.mxu0 %v1584
  %2193 = vmatprep.subr.bf16.mxu0 0
  %2194 = vmatpush1.bf16.msra.mxu0 %v1585
  %2195 = vmatprep.subr.bf16.mxu0 0
  %2196 = vmatpush1.bf16.msra.mxu0 %v1586
  %2197 = vmatprep.subr.bf16.mxu0 0
  %2198 = vmatpush1.bf16.msra.mxu0 %v1587
  %2199 = vmatprep.subr.bf16.mxu0 0
  %2200 = vmatpush1.bf16.msra.mxu0 %v1588
  %2201 = vmatprep.subr.bf16.mxu0 0
  %2202 = vmatpush1.bf16.msra.mxu0 %v1589
  %2203 = vmatprep.subr.bf16.mxu0 0
  %2204 = vmatpush1.bf16.msra.mxu0 %v1590
  %2205 = vmatprep.subr.bf16.mxu0 0
  %2206 = vmatpush1.bf16.msra.mxu0 %v1591
  %2207 = vmatprep.subr.bf16.mxu0 0
  %2208 = vmatpush1.bf16.msra.mxu0 %v1592
  %2209 = vmatprep.subr.bf16.mxu0 0
  %2210 = vmatpush1.bf16.msra.mxu0 %v1593
  %2211 = vmatprep.subr.bf16.mxu0 0
  %2212 = vmatpush1.bf16.msra.mxu0 %v1594
  %2213 = vmatprep.subr.bf16.mxu0 0
  %2214 = vmatpush1.bf16.msra.mxu0 %v1595
  %2215 = vmatprep.subr.bf16.mxu0 0
  %2216 = vmatpush1.bf16.msra.mxu0 %v1596
  %2217 = vmatprep.subr.bf16.mxu0 0
  %2218 = vmatpush1.bf16.msra.mxu0 %v1597
  %2219 = vmatprep.subr.bf16.mxu0 0
  %2220 = vmatpush1.bf16.msra.mxu0 %v1598
  %2221 = vmatprep.subr.bf16.mxu0 0
  %2222 = vmatpush1.bf16.msra.mxu0 %v1599
  %2223 = vmatprep.mubr.bf16.mxu0 %v569
  %2224 = vmatmul.mubr.bf16.gmra.mrb[0].mxu0 %v568
  %v2225 = vpop.f32.mrb[0].mxu0
  %v2226 = vadd.f32 %v2185, %v2225
  %v2227 = vpop.f32.mrb[0].mxu0
  %v2228 = vpop.f32.mrb[0].mxu0
  %v2229 = vadd.f32 %v2188, %v2228
  %v2230 = vpop.f32.mrb[0].mxu0
  %2231 = vdwg.mxu0
  %2232 = vmatprep.subr.bf16.mxu0 0
  %2233 = vmatpush1.bf16.msra.mxu0 %v1600
  %2234 = vmatprep.subr.bf16.mxu0 0
  %2235 = vmatpush1.bf16.msra.mxu0 %v1601
  %2236 = vmatprep.subr.bf16.mxu0 0
  %2237 = vmatpush1.bf16.msra.mxu0 %v1602
  %2238 = vmatprep.subr.bf16.mxu0 0
  %2239 = vmatpush1.bf16.msra.mxu0 %v1603
  %2240 = vmatprep.subr.bf16.mxu0 0
  %2241 = vmatpush1.bf16.msra.mxu0 %v1604
  %2242 = vmatprep.subr.bf16.mxu0 0
  %2243 = vmatpush1.bf16.msra.mxu0 %v1605
  %2244 = vmatprep.subr.bf16.mxu0 0
  %2245 = vmatpush1.bf16.msra.mxu0 %v1606
  %2246 = vmatprep.subr.bf16.mxu0 0
  %2247 = vmatpush1.bf16.msra.mxu0 %v1607
  %2248 = vmatprep.subr.bf16.mxu0 0
  %2249 = vmatpush1.bf16.msra.mxu0 %v1608
  %2250 = vmatprep.subr.bf16.mxu0 0
  %2251 = vmatpush1.bf16.msra.mxu0 %v1609
  %2252 = vmatprep.subr.bf16.mxu0 0
  %2253 = vmatpush1.bf16.msra.mxu0 %v1610
  %2254 = vmatprep.subr.bf16.mxu0 0
  %2255 = vmatpush1.bf16.msra.mxu0 %v1611
  %2256 = vmatprep.subr.bf16.mxu0 0
  %2257 = vmatpush1.bf16.msra.mxu0 %v1612
  %2258 = vmatprep.subr.bf16.mxu0 0
  %2259 = vmatpush1.bf16.msra.mxu0 %v1613
  %2260 = vmatprep.subr.bf16.mxu0 0
  %2261 = vmatpush1.bf16.msra.mxu0 %v1614
  %2262 = vmatprep.subr.bf16.mxu0 0
  %2263 = vmatpush1.bf16.msra.mxu0 %v1615
  %2264 = vmatprep.mubr.bf16.mxu0 %v571
  %2265 = vmatmul.mubr.bf16.gmra.mrb[0].mxu0 %v570
  %v2266 = vpop.f32.mrb[0].mxu0
  %v2267 = vadd.f32 %v2226, %v2266
  %v2268 = vpop.f32.mrb[0].mxu0
  %v2269 = vpop.f32.mrb[0].mxu0
  %v2270 = vadd.f32 %v2229, %v2269
  %v2271 = vpop.f32.mrb[0].mxu0
  %2272 = vdwg.mxu0
  %2273 = vmatprep.subr.bf16.mxu0 0
  %2274 = vmatpush1.bf16.msra.mxu0 %v1616
  %2275 = vmatprep.subr.bf16.mxu0 0
  %2276 = vmatpush1.bf16.msra.mxu0 %v1617
  %2277 = vmatprep.subr.bf16.mxu0 0
  %2278 = vmatpush1.bf16.msra.mxu0 %v1618
  %2279 = vmatprep.subr.bf16.mxu0 0
  %2280 = vmatpush1.bf16.msra.mxu0 %v1619
  %2281 = vmatprep.subr.bf16.mxu0 0
  %2282 = vmatpush1.bf16.msra.mxu0 %v1620
  %2283 = vmatprep.subr.bf16.mxu0 0
  %2284 = vmatpush1.bf16.msra.mxu0 %v1621
  %2285 = vmatprep.subr.bf16.mxu0 0
  %2286 = vmatpush1.bf16.msra.mxu0 %v1622
  %2287 = vmatprep.subr.bf16.mxu0 0
  %2288 = vmatpush1.bf16.msra.mxu0 %v1623
  %2289 = vmatprep.subr.bf16.mxu0 0
  %2290 = vmatpush1.bf16.msra.mxu0 %v1624
  %2291 = vmatprep.subr.bf16.mxu0 0
  %2292 = vmatpush1.bf16.msra.mxu0 %v1625
  %2293 = vmatprep.subr.bf16.mxu0 0
  %2294 = vmatpush1.bf16.msra.mxu0 %v1626
  %2295 = vmatprep.subr.bf16.mxu0 0
  %2296 = vmatpush1.bf16.msra.mxu0 %v1627
  %2297 = vmatprep.subr.bf16.mxu0 0
  %2298 = vmatpush1.bf16.msra.mxu0 %v1628
  %2299 = vmatprep.subr.bf16.mxu0 0
  %2300 = vmatpush1.bf16.msra.mxu0 %v1629
  %2301 = vmatprep.subr.bf16.mxu0 0
  %2302 = vmatpush1.bf16.msra.mxu0 %v1630
  %2303 = vmatprep.subr.bf16.mxu0 0
  %2304 = vmatpush1.bf16.msra.mxu0 %v1631
  %2305 = vmatprep.mubr.bf16.mxu0 %v573
  %2306 = vmatmul.mubr.bf16.gmra.mrb[0].mxu0 %v572
  %v2307 = vpop.f32.mrb[0].mxu0
  %v2308 = vadd.f32 %v2267, %v2307
  %v2309 = vpop.f32.mrb[0].mxu0
  %v2310 = vpop.f32.mrb[0].mxu0
  %v2311 = vadd.f32 %v2270, %v2310
  %v2312 = vpop.f32.mrb[0].mxu0
  %2313 = vdwg.mxu0
  %2314 = vmatprep.subr.bf16.mxu0 0
  %2315 = vmatpush1.bf16.msra.mxu0 %v1632
  %2316 = vmatprep.subr.bf16.mxu0 0
  %2317 = vmatpush1.bf16.msra.mxu0 %v1633
  %2318 = vmatprep.subr.bf16.mxu0 0
  %2319 = vmatpush1.bf16.msra.mxu0 %v1634
  %2320 = vmatprep.subr.bf16.mxu0 0
  %2321 = vmatpush1.bf16.msra.mxu0 %v1635
  %2322 = vmatprep.subr.bf16.mxu0 0
  %2323 = vmatpush1.bf16.msra.mxu0 %v1636
  %2324 = vmatprep.subr.bf16.mxu0 0
  %2325 = vmatpush1.bf16.msra.mxu0 %v1637
  %2326 = vmatprep.subr.bf16.mxu0 0
  %2327 = vmatpush1.bf16.msra.mxu0 %v1638
  %2328 = vmatprep.subr.bf16.mxu0 0
  %2329 = vmatpush1.bf16.msra.mxu0 %v1639
  %2330 = vmatprep.subr.bf16.mxu0 0
  %2331 = vmatpush1.bf16.msra.mxu0 %v1640
  %2332 = vmatprep.subr.bf16.mxu0 0
  %2333 = vmatpush1.bf16.msra.mxu0 %v1641
  %2334 = vmatprep.subr.bf16.mxu0 0
  %2335 = vmatpush1.bf16.msra.mxu0 %v1642
  %2336 = vmatprep.subr.bf16.mxu0 0
  %2337 = vmatpush1.bf16.msra.mxu0 %v1643
  %2338 = vmatprep.subr.bf16.mxu0 0
  %2339 = vmatpush1.bf16.msra.mxu0 %v1644
  %2340 = vmatprep.subr.bf16.mxu0 0
  %2341 = vmatpush1.bf16.msra.mxu0 %v1645
  %2342 = vmatprep.subr.bf16.mxu0 0
  %2343 = vmatpush1.bf16.msra.mxu0 %v1646
  %2344 = vmatprep.subr.bf16.mxu0 0
  %2345 = vmatpush1.bf16.msra.mxu0 %v1647
  %2346 = vmatprep.mubr.bf16.mxu0 %v575
  %2347 = vmatmul.mubr.bf16.gmra.mrb[0].mxu0 %v574
  %v2348 = vpop.f32.mrb[0].mxu0
  %v2349 = vadd.f32 %v2308, %v2348
  %v2350 = vpop.f32.mrb[0].mxu0
  %v2351 = vpop.f32.mrb[0].mxu0
  %v2352 = vadd.f32 %v2311, %v2351
  %v2353 = vpop.f32.mrb[0].mxu0
  %2354 = vdwg.mxu0
  %2355 = vmatprep.subr.bf16.mxu0 0
  %2356 = vmatpush1.bf16.msra.mxu0 %v1648
  %2357 = vmatprep.subr.bf16.mxu0 0
  %2358 = vmatpush1.bf16.msra.mxu0 %v1649
  %2359 = vmatprep.subr.bf16.mxu0 0
  %2360 = vmatpush1.bf16.msra.mxu0 %v1650
  %2361 = vmatprep.subr.bf16.mxu0 0
  %2362 = vmatpush1.bf16.msra.mxu0 %v1651
  %2363 = vmatprep.subr.bf16.mxu0 0
  %2364 = vmatpush1.bf16.msra.mxu0 %v1652
  %2365 = vmatprep.subr.bf16.mxu0 0
  %2366 = vmatpush1.bf16.msra.mxu0 %v1653
  %2367 = vmatprep.subr.bf16.mxu0 0
  %2368 = vmatpush1.bf16.msra.mxu0 %v1654
  %2369 = vmatprep.subr.bf16.mxu0 0
  %2370 = vmatpush1.bf16.msra.mxu0 %v1655
  %2371 = vmatprep.subr.bf16.mxu0 0
  %2372 = vmatpush1.bf16.msra.mxu0 %v1656
  %2373 = vmatprep.subr.bf16.mxu0 0
  %2374 = vmatpush1.bf16.msra.mxu0 %v1657
  %2375 = vmatprep.subr.bf16.mxu0 0
  %2376 = vmatpush1.bf16.msra.mxu0 %v1658
  %2377 = vmatprep.subr.bf16.mxu0 0
  %2378 = vmatpush1.bf16.msra.mxu0 %v1659
  %2379 = vmatprep.subr.bf16.mxu0 0
  %2380 = vmatpush1.bf16.msra.mxu0 %v1660
  %2381 = vmatprep.subr.bf16.mxu0 0
  %2382 = vmatpush1.bf16.msra.mxu0 %v1661
  %2383 = vmatprep.subr.bf16.mxu0 0
  %2384 = vmatpush1.bf16.msra.mxu0 %v1662
  %2385 = vmatprep.subr.bf16.mxu0 0
  %2386 = vmatpush1.bf16.msra.mxu0 %v1663
  %2387 = vmatprep.mubr.bf16.mxu0 %v577
  %2388 = vmatmul.mubr.bf16.gmra.mrb[0].mxu0 %v576
  %v2389 = vpop.f32.mrb[0].mxu0
  %v2390 = vadd.f32 %v2349, %v2389
  %v2391 = vpop.f32.mrb[0].mxu0
  %v2392 = vpop.f32.mrb[0].mxu0
  %v2393 = vadd.f32 %v2352, %v2392
  %v2394 = vpop.f32.mrb[0].mxu0
  %2395 = vdwg.mxu0
  %2396 = vmatprep.subr.bf16.mxu0 0
  %2397 = vmatpush1.bf16.msra.mxu0 %v1664
  %2398 = vmatprep.subr.bf16.mxu0 0
  %2399 = vmatpush1.bf16.msra.mxu0 %v1665
  %2400 = vmatprep.subr.bf16.mxu0 0
  %2401 = vmatpush1.bf16.msra.mxu0 %v1666
  %2402 = vmatprep.subr.bf16.mxu0 0
  %2403 = vmatpush1.bf16.msra.mxu0 %v1667
  %2404 = vmatprep.subr.bf16.mxu0 0
  %2405 = vmatpush1.bf16.msra.mxu0 %v1668
  %2406 = vmatprep.subr.bf16.mxu0 0
  %2407 = vmatpush1.bf16.msra.mxu0 %v1669
  %2408 = vmatprep.subr.bf16.mxu0 0
  %2409 = vmatpush1.bf16.msra.mxu0 %v1670
  %2410 = vmatprep.subr.bf16.mxu0 0
  %2411 = vmatpush1.bf16.msra.mxu0 %v1671
  %2412 = vmatprep.subr.bf16.mxu0 0
  %2413 = vmatpush1.bf16.msra.mxu0 %v1672
  %2414 = vmatprep.subr.bf16.mxu0 0
  %2415 = vmatpush1.bf16.msra.mxu0 %v1673
  %2416 = vmatprep.subr.bf16.mxu0 0
  %2417 = vmatpush1.bf16.msra.mxu0 %v1674
  %2418 = vmatprep.subr.bf16.mxu0 0
  %2419 = vmatpush1.bf16.msra.mxu0 %v1675
  %2420 = vmatprep.subr.bf16.mxu0 0
  %2421 = vmatpush1.bf16.msra.mxu0 %v1676
  %2422 = vmatprep.subr.bf16.mxu0 0
  %2423 = vmatpush1.bf16.msra.mxu0 %v1677
  %2424 = vmatprep.subr.bf16.mxu0 0
  %2425 = vmatpush1.bf16.msra.mxu0 %v1678
  %2426 = vmatprep.subr.bf16.mxu0 0
  %2427 = vmatpush1.bf16.msra.mxu0 %v1679
  %2428 = vmatprep.mubr.bf16.mxu0 %v579
  %2429 = vmatmul.mubr.bf16.gmra.mrb[0].mxu0 %v578
  %v2430 = vpop.f32.mrb[0].mxu0
  %v2431 = vadd.f32 %v2390, %v2430
  %v2432 = vpop.f32.mrb[0].mxu0
  %v2433 = vpop.f32.mrb[0].mxu0
  %v2434 = vadd.f32 %v2393, %v2433
  %v2435 = vpop.f32.mrb[0].mxu0
  %2436 = vdwg.mxu0
  %2437 = vmatprep.subr.bf16.mxu0 0
  %2438 = vmatpush1.bf16.msra.mxu0 %v1680
  %2439 = vmatprep.subr.bf16.mxu0 0
  %2440 = vmatpush1.bf16.msra.mxu0 %v1681
  %2441 = vmatprep.subr.bf16.mxu0 0
  %2442 = vmatpush1.bf16.msra.mxu0 %v1682
  %2443 = vmatprep.subr.bf16.mxu0 0
  %2444 = vmatpush1.bf16.msra.mxu0 %v1683
  %2445 = vmatprep.subr.bf16.mxu0 0
  %2446 = vmatpush1.bf16.msra.mxu0 %v1684
  %2447 = vmatprep.subr.bf16.mxu0 0
  %2448 = vmatpush1.bf16.msra.mxu0 %v1685
  %2449 = vmatprep.subr.bf16.mxu0 0
  %2450 = vmatpush1.bf16.msra.mxu0 %v1686
  %2451 = vmatprep.subr.bf16.mxu0 0
  %2452 = vmatpush1.bf16.msra.mxu0 %v1687
  %2453 = vmatprep.subr.bf16.mxu0 0
  %2454 = vmatpush1.bf16.msra.mxu0 0
  %2455 = vmatprep.subr.bf16.mxu0 0
  %2456 = vmatpush1.bf16.msra.mxu0 0
  %2457 = vmatprep.subr.bf16.mxu0 0
  %2458 = vmatpush1.bf16.msra.mxu0 0
  %2459 = vmatprep.subr.bf16.mxu0 0
  %2460 = vmatpush1.bf16.msra.mxu0 0
  %2461 = vmatprep.subr.bf16.mxu0 0
  %2462 = vmatpush1.bf16.msra.mxu0 0
  %2463 = vmatprep.subr.bf16.mxu0 0
  %2464 = vmatpush1.bf16.msra.mxu0 0
  %2465 = vmatprep.subr.bf16.mxu0 0
  %2466 = vmatpush1.bf16.msra.mxu0 0
  %2467 = vmatprep.subr.bf16.mxu0 0
  %2468 = vmatpush1.bf16.msra.mxu0 0
  %2469 = vmatprep.mubr.bf16.mxu0 0
  %2470 = vmatmul.mubr.bf16.gmra.mrb[0].mxu0 %v580
  %v2471 = vpop.f32.mrb[0].mxu0
  %v2472 = vadd.f32 %v2431, %v2471
  %v2473 = vpop.f32.mrb[0].mxu0
  %v2474 = vpop.f32.mrb[0].mxu0
  %v2475 = vadd.f32 %v2434, %v2474
  %v2476 = vpop.f32.mrb[0].mxu0
  %2477 = vdwg.mxu0
  %2478 = vst [vmem:[%s2] sm:$0xff] %v2472
  %2479 = vst [vmem:[%s2 + $0x8] sm:$0xff] %v2475
  // Predicated region
  $region10: #{run.3} parent=0 // pred_check
    _
  $region11: #{run.3} parent=0 // pred_check_branch
    %2481 = sbr.rel (0) target = $region13
  $region12: #{run.3} parent=0 // pred_region
    _
  $region13: #{run.3} parent=0 // pred_fallthru
    _
  // Predicated region
  $region14: #{run.3} parent=0 // pred_check
    _
  $region15: #{run.3} parent=0 // pred_check_branch
    %2483 = sbr.rel (0) target = $region17
  $region16: #{run.3} parent=0 // pred_region
    _
  $region17: #{run.3} parent=0 // pred_fallthru
    _

</llo_original>
